<compile_context>
chip_gen: v7x
topology: tpu7x:2x2x1
jax: 0.10.0
libtpu: 0.0.40
codegen_flags: <defaults>
</compile_context>

<pallas_src>
import functools

import jax
import jax.numpy as jnp
from jax.experimental import pallas as pl
from jax.experimental.pallas import tpu as pltpu

LN_EPS = 1e-5
_VMEM_BUDGET = 48 << 20     # conservative: leaves headroom inside v7x's 64 MiB VMEM
_DEF_BT_CAP = 64


def _round_up(n, m):
    return ((n + m - 1) // m) * m


def _largest_divisor_leq(n, cap):
    cap = max(1, min(n, cap))
    for d in range(cap, 0, -1):
        if n % d == 0:
            return d
    return 1


def _pick_batch_tile(batch, requested, cap=_DEF_BT_CAP):
    """Multiple-of-8 batch tile (layout-trivial flattening, clean (8,128) tiling); prefers
    >= 2 batch tiles so the "parallel" grid axis can use both v7x TensorCores."""
    if requested is not None:
        return max(8, _round_up(int(requested), 8))
    padded = _round_up(batch, 8)
    cands = [bt for bt in range(8, min(max(cap, 8), padded) + 1, 8) if padded % bt == 0]
    bt = cands[-1]
    if padded // bt < 2:
        two = [c for c in cands if padded // c >= 2]
        if two:
            bt = two[-1]
    return bt


def _layer_norm(x2d, gamma_row, beta_row):
    """x2d: (M, D) f32; gamma/beta: (1, D). Biased variance, eps=1e-5 (nn.LayerNorm)."""
    mean = jnp.mean(x2d, axis=-1, keepdims=True)
    var = jnp.mean((x2d - mean) ** 2, axis=-1, keepdims=True)
    return (x2d - mean) * jax.lax.rsqrt(var + LN_EPS) * gamma_row + beta_row


def mamba_block_kernel(
    x_ref,      # (LT, BT, D)  time-major input tile
    gamma_ref,  # (1, D)  f32  LayerNorm weight
    beta_ref,   # (1, D)  f32  LayerNorm bias
    At_ref,     # (S, S)  f32  A.T  (recurrence stays f32)
    Bt_ref,     # (D, S)  mm   B.T
    WCt_ref,    # (S, D)  mm   (W @ C).T   -- final Linear folded in (f32 fold on host)
    WDt_ref,    # (D, D)  mm   (W @ D).T
    bias_ref,   # (1, D)  f32  final Linear bias
    out_ref,    # (LT, BT, D)  time-major output tile
    h_ref,      # scratch (BT, S)      f32  recurrent state, carried across L tiles
    xbt_ref,    # scratch (LT, BT, S)  f32  xn @ B.T, time-major
    hist_ref,   # scratch (LT, BT, S)  f32  recurrent-state history, time-major
    xn_ref,     # scratch (LT*BT, D)   mm   cached LayerNorm output (no 2nd LN pass)
):
    LT, BT, D = x_ref.shape
    S = At_ref.shape[0]
    M = LT * BT
    mm_dtype = Bt_ref.dtype

    # Reset the recurrent state at the start of every sequence (first L tile).
    @pl.when(pl.program_id(1) == 0)
    def _():
        h_ref[...] = jnp.zeros_like(h_ref)

    # ---- Phase 1: LayerNorm + input->state projection as one flattened MXU matmul.
    #      (BT is a multiple of 8, so collapsing the leading dims is layout-trivial.)
    x_f32 = x_ref[...].astype(jnp.float32).reshape(M, D)
    xn = _layer_norm(x_f32, gamma_ref[...], beta_ref[...]).astype(mm_dtype)   # (M, D)
    xn_ref[...] = xn
    xb = jnp.dot(xn, Bt_ref[...], preferred_element_type=jnp.float32)         # (M, S)
    xbt_ref[...] = xb.reshape(LT, BT, S)

    # ---- Phase 2: serial recurrence; only h_t = tanh(h_{t-1} @ A.T + XB[t]) stays in the
    #      loop, batched over the BT rows of h (f32 carry).
    At = At_ref[...]

    def step(t, h):
        h_new = jnp.tanh(
            jnp.dot(h, At, preferred_element_type=jnp.float32) + xbt_ref[t]
        )                                                                      # (BT, S)
        hist_ref[t] = h_new
        return h_new

    unroll = True if LT <= 32 else 8
    h_ref[...] = jax.lax.fori_loop(0, LT, step, h_ref[...], unroll=unroll)

    # ---- Phase 3: output projections (final Linear folded in) + bias + residual,
    #      as flattened MXU matmuls.  Residual is re-read from the VMEM x tile.
    hist_flat = hist_ref[...].reshape(M, S).astype(mm_dtype)
    resid = x_ref[...].astype(jnp.float32).reshape(M, D)
    out = (
        jnp.dot(hist_flat, WCt_ref[...], preferred_element_type=jnp.float32)
        + jnp.dot(xn_ref[...], WDt_ref[...], preferred_element_type=jnp.float32)
        + bias_ref[...]
        + resid
    )
    out_ref[...] = out.reshape(LT, BT, D).astype(out_ref.dtype)


@functools.partial(jax.jit, static_argnames=("batch_tile", "seq_tile", "matmul_dtype"))
def mamba_block(x, gamma, beta, A, Bm, C, Dm, W, bias, *,
                batch_tile=None, seq_tile=None, matmul_dtype=jnp.bfloat16):
    Bsz, L, D = x.shape
    S = A.shape[0]
    x_isz = jnp.dtype(x.dtype).itemsize
    mm_isz = jnp.dtype(matmul_dtype).itemsize

    BT = _pick_batch_tile(Bsz, batch_tile)
    LT = _largest_divisor_leq(L, int(seq_tile) if seq_tile is not None else min(L, 512))

    def vmem_need(bt, lt):
        tiles = 2 * lt * bt * D * (2 * x_isz)                                  # x + out, 2-buf
        weights = 2 * (S * S * 4 + 2 * D * S * mm_isz + D * D * mm_isz + 3 * D * 4)
        scratch = bt * S * 4 + 2 * lt * bt * S * 4 + lt * bt * D * mm_isz
        return tiles + weights + scratch

    # Shrink LT first (keeps the scan's per-step M = BT large), then BT, to fit the budget.
    while vmem_need(BT, LT) > _VMEM_BUDGET and LT > 1:
        LT = _largest_divisor_leq(L, LT - 1)
    while vmem_need(BT, LT) > _VMEM_BUDGET and BT > 8:
        BT -= 8

    PB = _round_up(Bsz, BT)
    nb, nl = PB // BT, L // LT
    need = vmem_need(BT, LT)
    vmem_limit = int(min(max(need + need // 4 + (2 << 20), 32 << 20), 100 << 20))

    # ---- Host-side weight prep: f32 algebra (fold W into C/D in f32), pre-transposed to
    #      (K, N), big MXU operands cast to matmul_dtype.
    hi = jax.lax.Precision.HIGHEST
    gamma2 = gamma.reshape(1, D).astype(jnp.float32)
    beta2 = beta.reshape(1, D).astype(jnp.float32)
    bias2 = bias.reshape(1, D).astype(jnp.float32)
    A_t = jnp.transpose(A.astype(jnp.float32))                                  # (S, S) f32
    B_t = jnp.transpose(Bm.astype(jnp.float32)).astype(matmul_dtype)            # (D, S)
    Wf, Cf, Df = W.astype(jnp.float32), C.astype(jnp.float32), Dm.astype(jnp.float32)
    WC_t = jnp.transpose(jnp.matmul(Wf, Cf, precision=hi)).astype(matmul_dtype)  # (S, D)
    WD_t = jnp.transpose(jnp.matmul(Wf, Df, precision=hi)).astype(matmul_dtype)  # (D, D)

    # ---- Layout plumbing (stays in XLA): pad batch to a multiple of BT, go time-major.
    xp = x if PB == Bsz else jnp.pad(x, ((0, PB - Bsz), (0, 0), (0, 0)))
    x_tm = jnp.swapaxes(xp, 0, 1)                                                # (L, PB, D)

    grid_spec = pltpu.PrefetchScalarGridSpec(
        num_scalar_prefetch=0,
        grid=(nb, nl),
        in_specs=[
            pl.BlockSpec((LT, BT, D), lambda b, l: (l, b, 0)),   # x (time-major)
            pl.BlockSpec((1, D), lambda b, l: (0, 0)),           # gamma
            pl.BlockSpec((1, D), lambda b, l: (0, 0)),           # beta
            pl.BlockSpec((S, S), lambda b, l: (0, 0)),           # A.T
            pl.BlockSpec((D, S), lambda b, l: (0, 0)),           # B.T
            pl.BlockSpec((S, D), lambda b, l: (0, 0)),           # (W C).T
            pl.BlockSpec((D, D), lambda b, l: (0, 0)),           # (W D).T
            pl.BlockSpec((1, D), lambda b, l: (0, 0)),           # bias
        ],
        out_specs=pl.BlockSpec((LT, BT, D), lambda b, l: (l, b, 0)),
        scratch_shapes=[
            pltpu.VMEM((BT, S), jnp.float32),         # h carried across the sequential L axis
            pltpu.VMEM((LT, BT, S), jnp.float32),     # XB, time-major
            pltpu.VMEM((LT, BT, S), jnp.float32),     # H history, time-major
            pltpu.VMEM((LT * BT, D), matmul_dtype),   # cached xn
        ],
    )

    out_tm = pl.pallas_call(
        mamba_block_kernel,
        out_shape=jax.ShapeDtypeStruct((L, PB, D), x.dtype),
        grid_spec=grid_spec,
        compiler_params=pltpu.CompilerParams(
            dimension_semantics=("parallel", "arbitrary"),   # batch parallel, time sequential
            vmem_limit_bytes=vmem_limit,
        ),
    )(x_tm, gamma2, beta2, A_t, B_t, WC_t, WD_t, bias2)

    out = jnp.swapaxes(out_tm, 0, 1)
    return out if PB == Bsz else out[:Bsz]


def mamba_block_reference(x, gamma, beta, A, Bm, C, Dm, W, bias):
    """Pure-JAX f32 replica of the PyTorch forward (eval mode, un-folded)."""
    mean = x.mean(-1, keepdims=True)
    var = ((x - mean) ** 2).mean(-1, keepdims=True)
    xn = (x - mean) / jnp.sqrt(var + LN_EPS) * gamma + beta
    Bsz, L, _ = x.shape
    h = jnp.zeros((Bsz, A.shape[0]), jnp.float32)
    ys = []
    for t in range(L):
        u = xn[:, t, :]
        h = jnp.tanh(h @ A.T + u @ Bm.T)
        ys.append(h @ C.T + u @ Dm.T)
    y = jnp.stack(ys, axis=1)
    return y @ W.T + bias + x


if __name__ == "__main__":
    d_model, d_state = 32, 16
    batch, seq = 2, 8

    key = jax.random.PRNGKey(0)
    ks = jax.random.split(key, 8)

    x = jax.random.normal(ks[0], (batch, seq, d_model), jnp.float32)

    # Deterministic parameter init (shapes per module __init__).
    gamma = jnp.ones((d_model,), jnp.float32)            # nn.LayerNorm weight
    beta = jnp.zeros((d_model,), jnp.float32)            # nn.LayerNorm bias
    A = jax.random.normal(ks[1], (d_state, d_state), jnp.float32)
    Bm = jax.random.normal(ks[2], (d_state, d_model), jnp.float32)
    C = jax.random.normal(ks[3], (d_model, d_state), jnp.float32)
    Dm = jax.random.normal(ks[4], (d_model, d_model), jnp.float32)
    W = jax.random.normal(ks[5], (d_model, d_model), jnp.float32) / jnp.sqrt(d_model)
    bias = jax.random.normal(ks[6], (d_model,), jnp.float32) * 0.01

    out = mamba_block(x, gamma, beta, A, Bm, C, Dm, W, bias)
    out = jax.block_until_ready(out)

    ref = mamba_block_reference(x, gamma, beta, A, Bm, C, Dm, W, bias)
    assert out.shape == (batch, seq, d_model)
    err = float(jnp.max(jnp.abs(out - ref)))
    scale = float(jnp.max(jnp.abs(ref)))
    # bf16 MXU inputs with f32 accumulation -> error scales with the data magnitude.
    assert err <= 2e-2 * scale + 2e-2, f"max abs err {err} (ref scale {scale})"

    print("KERNEL_OK")
</pallas_src>

<mosaic_0001>
module attributes {stable_mosaic.version = 11 : i64} {
  func.func @mamba_block_kernel(%arg0: i32, %arg1: i32, %arg2: memref<8x8x32xf32, #tpu.memory_space<vmem>>, %arg3: memref<1x32xf32, #tpu.memory_space<vmem>>, %arg4: memref<1x32xf32, #tpu.memory_space<vmem>>, %arg5: memref<16x16xf32, #tpu.memory_space<vmem>>, %arg6: memref<32x16xbf16, #tpu.memory_space<vmem>>, %arg7: memref<16x32xbf16, #tpu.memory_space<vmem>>, %arg8: memref<32x32xbf16, #tpu.memory_space<vmem>>, %arg9: memref<1x32xf32, #tpu.memory_space<vmem>>, %arg10: memref<8x8x32xf32, #tpu.memory_space<vmem>>, %arg11: memref<8x16xf32, #tpu.memory_space<vmem>>, %arg12: memref<8x8x16xf32, #tpu.memory_space<vmem>>, %arg13: memref<8x8x16xf32, #tpu.memory_space<vmem>>, %arg14: memref<64x32xbf16, #tpu.memory_space<vmem>>) attributes {dimension_semantics = [#tpu.dimension_semantics<parallel>, #tpu.dimension_semantics<arbitrary>], iteration_bounds = array<i64: 1, 1>, scalar_prefetch = 0 : i64, scratch_operands = 4 : i64, tpu.core_type = #tpu.core_type<tc>, window_params = [{transform_indices = @transform_0, window_bounds = array<i64: 8, 8, 32>}, {pipeline_mode = #tpu.pipeline_mode<synchronous>, transform_indices = @transform_1, window_bounds = array<i64: 1, 32>}, {pipeline_mode = #tpu.pipeline_mode<synchronous>, transform_indices = @transform_2, window_bounds = array<i64: 1, 32>}, {pipeline_mode = #tpu.pipeline_mode<synchronous>, transform_indices = @transform_3, window_bounds = array<i64: 16, 16>}, {pipeline_mode = #tpu.pipeline_mode<synchronous>, transform_indices = @transform_4, window_bounds = array<i64: 32, 16>}, {pipeline_mode = #tpu.pipeline_mode<synchronous>, transform_indices = @transform_5, window_bounds = array<i64: 16, 32>}, {pipeline_mode = #tpu.pipeline_mode<synchronous>, transform_indices = @transform_6, window_bounds = array<i64: 32, 32>}, {pipeline_mode = #tpu.pipeline_mode<synchronous>, transform_indices = @transform_7, window_bounds = array<i64: 1, 32>}, {transform_indices = @transform_8, window_bounds = array<i64: 8, 8, 32>}]} {
    %c0_i32 = arith.constant 0 : i32
    %0 = arith.cmpi eq, %arg1, %c0_i32 : i32
    %1 = arith.extui %0 : i1 to i32
    %c0_i32_0 = arith.constant 0 : i32
    %2 = arith.cmpi ne, %1, %c0_i32_0 : i32
    scf.if %2 {
      %cst_85 = arith.constant 0.000000e+00 : f32
      %135 = vector.broadcast %cst_85 : f32 to vector<8x16xf32>
      %c0_86 = arith.constant 0 : index
      %c0_87 = arith.constant 0 : index
      %136 = vector.load %arg11[%c0_86, %c0_87] : memref<8x16xf32, #tpu.memory_space<vmem>>, vector<8x16xf32>
      tpu.vector_store %arg11[%c0_86, %c0_87], %135 {strides = array<i32>} : memref<8x16xf32, #tpu.memory_space<vmem>>, vector<8x16xf32>,
    } else {
    }
    %c0 = arith.constant 0 : index
    %c0_1 = arith.constant 0 : index
    %c0_2 = arith.constant 0 : index
    %3 = vector.load %arg2[%c0, %c0_1, %c0_2] : memref<8x8x32xf32, #tpu.memory_space<vmem>>, vector<8x8x32xf32>
    %4 = vector.shape_cast %3 : vector<8x8x32xf32> to vector<64x32xf32>
    %c0_3 = arith.constant 0 : index
    %c0_4 = arith.constant 0 : index
    %5 = vector.load %arg3[%c0_3, %c0_4] : memref<1x32xf32, #tpu.memory_space<vmem>>, vector<1x32xf32>
    %c0_5 = arith.constant 0 : index
    %c0_6 = arith.constant 0 : index
    %6 = vector.load %arg4[%c0_5, %c0_6] : memref<1x32xf32, #tpu.memory_space<vmem>>, vector<1x32xf32>
    %cst = arith.constant dense<0.000000e+00> : vector<64xf32>
    %7 = vector.multi_reduction <add>, %4, %cst [1] : vector<64x32xf32> to vector<64xf32>
    %8 = vector.shape_cast %7 : vector<64xf32> to vector<64x1xf32>
    %cst_7 = arith.constant 3.200000e+01 : f32
    %9 = vector.broadcast %cst_7 : f32 to vector<64x1xf32>
    %10 = arith.divf %8, %9 : vector<64x1xf32>
    %11 = vector.broadcast %10 : vector<64x1xf32> to vector<64x32xf32>
    %12 = arith.subf %4, %11 : vector<64x32xf32>
    %13 = arith.mulf %12, %12 : vector<64x32xf32>
    %cst_8 = arith.constant dense<0.000000e+00> : vector<64xf32>
    %14 = vector.multi_reduction <add>, %13, %cst_8 [1] : vector<64x32xf32> to vector<64xf32>
    %15 = vector.shape_cast %14 : vector<64xf32> to vector<64x1xf32>
    %cst_9 = arith.constant 3.200000e+01 : f32
    %16 = vector.broadcast %cst_9 : f32 to vector<64x1xf32>
    %17 = arith.divf %15, %16 : vector<64x1xf32>
    %18 = vector.broadcast %10 : vector<64x1xf32> to vector<64x32xf32>
    %19 = arith.subf %4, %18 : vector<64x32xf32>
    %cst_10 = arith.constant 9.99999974E-6 : f32
    %20 = vector.broadcast %cst_10 : f32 to vector<64x1xf32>
    %21 = arith.addf %17, %20 : vector<64x1xf32>
    %22 = math.rsqrt %21 : vector<64x1xf32>
    %23 = vector.broadcast %22 : vector<64x1xf32> to vector<64x32xf32>
    %24 = arith.mulf %19, %23 : vector<64x32xf32>
    %25 = vector.broadcast %5 : vector<1x32xf32> to vector<64x32xf32>
    %26 = arith.mulf %24, %25 : vector<64x32xf32>
    %27 = vector.broadcast %6 : vector<1x32xf32> to vector<64x32xf32>
    %28 = arith.addf %26, %27 : vector<64x32xf32>
    %29 = arith.truncf %28 : vector<64x32xf32> to vector<64x32xbf16>
    %c0_11 = arith.constant 0 : index
    %c0_12 = arith.constant 0 : index
    %30 = vector.load %arg14[%c0_11, %c0_12] : memref<64x32xbf16, #tpu.memory_space<vmem>>, vector<64x32xbf16>
    tpu.vector_store %arg14[%c0_11, %c0_12], %29 {strides = array<i32>} : memref<64x32xbf16, #tpu.memory_space<vmem>>, vector<64x32xbf16>,
    %c0_13 = arith.constant 0 : index
    %c0_14 = arith.constant 0 : index
    %31 = vector.load %arg6[%c0_13, %c0_14] : memref<32x16xbf16, #tpu.memory_space<vmem>>, vector<32x16xbf16>
    %cst_15 = arith.constant dense<0.000000e+00> : vector<64x16xf32>
    %32 = tpu.matmul %29, %31, %cst_15 {dimension_numbers = #tpu.dot_dimension_numbers<[1], [0], [0], [1], [0, 0, 1, 1], [], []>} : vector<64x32xbf16>, vector<32x16xbf16>, vector<64x16xf32> -> vector<64x16xf32>
    %33 = vector.shape_cast %32 : vector<64x16xf32> to vector<8x8x16xf32>
    %c0_16 = arith.constant 0 : index
    %c0_17 = arith.constant 0 : index
    %c0_18 = arith.constant 0 : index
    %34 = vector.load %arg12[%c0_16, %c0_17, %c0_18] : memref<8x8x16xf32, #tpu.memory_space<vmem>>, vector<8x8x16xf32>
    tpu.vector_store %arg12[%c0_16, %c0_17, %c0_18], %33 {strides = array<i32>} : memref<8x8x16xf32, #tpu.memory_space<vmem>>, vector<8x8x16xf32>,
    %c0_19 = arith.constant 0 : index
    %c0_20 = arith.constant 0 : index
    %35 = vector.load %arg5[%c0_19, %c0_20] : memref<16x16xf32, #tpu.memory_space<vmem>>, vector<16x16xf32>
    %c0_21 = arith.constant 0 : index
    %c0_22 = arith.constant 0 : index
    %36 = vector.load %arg11[%c0_21, %c0_22] : memref<8x16xf32, #tpu.memory_space<vmem>>, vector<8x16xf32>
    %c0_i32_23 = arith.constant 0 : i32
    %cst_24 = arith.constant dense<0.000000e+00> : vector<8x16xf32>
    %37 = tpu.matmul %36, %35, %cst_24 {dimension_numbers = #tpu.dot_dimension_numbers<[1], [0], [0], [1], [0, 0, 1, 1], [], []>} : vector<8x16xf32>, vector<16x16xf32>, vector<8x16xf32> -> vector<8x16xf32>
    %38 = arith.index_cast %c0_i32_23 : i32 to index
    %c0_25 = arith.constant 0 : index
    %c0_26 = arith.constant 0 : index
    %39 = vector.load %arg12[%38, %c0_25, %c0_26] : memref<8x8x16xf32, #tpu.memory_space<vmem>>, vector<1x8x16xf32>
    %40 = vector.shape_cast %39 : vector<1x8x16xf32> to vector<8x16xf32>
    %41 = arith.addf %37, %40 : vector<8x16xf32>
    %42 = math.tanh %41 : vector<8x16xf32>
    %43 = arith.index_cast %c0_i32_23 : i32 to index
    %c0_27 = arith.constant 0 : index
    %c0_28 = arith.constant 0 : index
    %44 = vector.load %arg13[%43, %c0_27, %c0_28] : memref<8x8x16xf32, #tpu.memory_space<vmem>>, vector<1x8x16xf32>
    %45 = vector.shape_cast %44 : vector<1x8x16xf32> to vector<8x16xf32>
    %46 = vector.shape_cast %42 : vector<8x16xf32> to vector<1x8x16xf32>
    tpu.vector_store %arg13[%43, %c0_27, %c0_28], %46 {strides = array<i32>} : memref<8x8x16xf32, #tpu.memory_space<vmem>>, vector<1x8x16xf32>,
    %c1_i32 = arith.constant 1 : i32
    %cst_29 = arith.constant dense<0.000000e+00> : vector<8x16xf32>
    %47 = tpu.matmul %42, %35, %cst_29 {dimension_numbers = #tpu.dot_dimension_numbers<[1], [0], [0], [1], [0, 0, 1, 1], [], []>} : vector<8x16xf32>, vector<16x16xf32>, vector<8x16xf32> -> vector<8x16xf32>
    %48 = arith.index_cast %c1_i32 : i32 to index
    %c0_30 = arith.constant 0 : index
    %c0_31 = arith.constant 0 : index
    %49 = vector.load %arg12[%48, %c0_30, %c0_31] : memref<8x8x16xf32, #tpu.memory_space<vmem>>, vector<1x8x16xf32>
    %50 = vector.shape_cast %49 : vector<1x8x16xf32> to vector<8x16xf32>
    %51 = arith.addf %47, %50 : vector<8x16xf32>
    %52 = math.tanh %51 : vector<8x16xf32>
    %53 = arith.index_cast %c1_i32 : i32 to index
    %c0_32 = arith.constant 0 : index
    %c0_33 = arith.constant 0 : index
    %54 = vector.load %arg13[%53, %c0_32, %c0_33] : memref<8x8x16xf32, #tpu.memory_space<vmem>>, vector<1x8x16xf32>
    %55 = vector.shape_cast %54 : vector<1x8x16xf32> to vector<8x16xf32>
    %56 = vector.shape_cast %52 : vector<8x16xf32> to vector<1x8x16xf32>
    tpu.vector_store %arg13[%53, %c0_32, %c0_33], %56 {strides = array<i32>} : memref<8x8x16xf32, #tpu.memory_space<vmem>>, vector<1x8x16xf32>,
    %c2_i32 = arith.constant 2 : i32
    %cst_34 = arith.constant dense<0.000000e+00> : vector<8x16xf32>
    %57 = tpu.matmul %52, %35, %cst_34 {dimension_numbers = #tpu.dot_dimension_numbers<[1], [0], [0], [1], [0, 0, 1, 1], [], []>} : vector<8x16xf32>, vector<16x16xf32>, vector<8x16xf32> -> vector<8x16xf32>
    %58 = arith.index_cast %c2_i32 : i32 to index
    %c0_35 = arith.constant 0 : index
    %c0_36 = arith.constant 0 : index
    %59 = vector.load %arg12[%58, %c0_35, %c0_36] : memref<8x8x16xf32, #tpu.memory_space<vmem>>, vector<1x8x16xf32>
    %60 = vector.shape_cast %59 : vector<1x8x16xf32> to vector<8x16xf32>
    %61 = arith.addf %57, %60 : vector<8x16xf32>
    %62 = math.tanh %61 : vector<8x16xf32>
    %63 = arith.index_cast %c2_i32 : i32 to index
    %c0_37 = arith.constant 0 : index
    %c0_38 = arith.constant 0 : index
    %64 = vector.load %arg13[%63, %c0_37, %c0_38] : memref<8x8x16xf32, #tpu.memory_space<vmem>>, vector<1x8x16xf32>
    %65 = vector.shape_cast %64 : vector<1x8x16xf32> to vector<8x16xf32>
    %66 = vector.shape_cast %62 : vector<8x16xf32> to vector<1x8x16xf32>
    tpu.vector_store %arg13[%63, %c0_37, %c0_38], %66 {strides = array<i32>} : memref<8x8x16xf32, #tpu.memory_space<vmem>>, vector<1x8x16xf32>,
    %c3_i32 = arith.constant 3 : i32
    %cst_39 = arith.constant dense<0.000000e+00> : vector<8x16xf32>
    %67 = tpu.matmul %62, %35, %cst_39 {dimension_numbers = #tpu.dot_dimension_numbers<[1], [0], [0], [1], [0, 0, 1, 1], [], []>} : vector<8x16xf32>, vector<16x16xf32>, vector<8x16xf32> -> vector<8x16xf32>
    %68 = arith.index_cast %c3_i32 : i32 to index
    %c0_40 = arith.constant 0 : index
    %c0_41 = arith.constant 0 : index
    %69 = vector.load %arg12[%68, %c0_40, %c0_41] : memref<8x8x16xf32, #tpu.memory_space<vmem>>, vector<1x8x16xf32>
    %70 = vector.shape_cast %69 : vector<1x8x16xf32> to vector<8x16xf32>
    %71 = arith.addf %67, %70 : vector<8x16xf32>
    %72 = math.tanh %71 : vector<8x16xf32>
    %73 = arith.index_cast %c3_i32 : i32 to index
    %c0_42 = arith.constant 0 : index
    %c0_43 = arith.constant 0 : index
    %74 = vector.load %arg13[%73, %c0_42, %c0_43] : memref<8x8x16xf32, #tpu.memory_space<vmem>>, vector<1x8x16xf32>
    %75 = vector.shape_cast %74 : vector<1x8x16xf32> to vector<8x16xf32>
    %76 = vector.shape_cast %72 : vector<8x16xf32> to vector<1x8x16xf32>
    tpu.vector_store %arg13[%73, %c0_42, %c0_43], %76 {strides = array<i32>} : memref<8x8x16xf32, #tpu.memory_space<vmem>>, vector<1x8x16xf32>,
    %c4_i32 = arith.constant 4 : i32
    %cst_44 = arith.constant dense<0.000000e+00> : vector<8x16xf32>
    %77 = tpu.matmul %72, %35, %cst_44 {dimension_numbers = #tpu.dot_dimension_numbers<[1], [0], [0], [1], [0, 0, 1, 1], [], []>} : vector<8x16xf32>, vector<16x16xf32>, vector<8x16xf32> -> vector<8x16xf32>
    %78 = arith.index_cast %c4_i32 : i32 to index
    %c0_45 = arith.constant 0 : index
    %c0_46 = arith.constant 0 : index
    %79 = vector.load %arg12[%78, %c0_45, %c0_46] : memref<8x8x16xf32, #tpu.memory_space<vmem>>, vector<1x8x16xf32>
    %80 = vector.shape_cast %79 : vector<1x8x16xf32> to vector<8x16xf32>
    %81 = arith.addf %77, %80 : vector<8x16xf32>
    %82 = math.tanh %81 : vector<8x16xf32>
    %83 = arith.index_cast %c4_i32 : i32 to index
    %c0_47 = arith.constant 0 : index
    %c0_48 = arith.constant 0 : index
    %84 = vector.load %arg13[%83, %c0_47, %c0_48] : memref<8x8x16xf32, #tpu.memory_space<vmem>>, vector<1x8x16xf32>
    %85 = vector.shape_cast %84 : vector<1x8x16xf32> to vector<8x16xf32>
    %86 = vector.shape_cast %82 : vector<8x16xf32> to vector<1x8x16xf32>
    tpu.vector_store %arg13[%83, %c0_47, %c0_48], %86 {strides = array<i32>} : memref<8x8x16xf32, #tpu.memory_space<vmem>>, vector<1x8x16xf32>,
    %c5_i32 = arith.constant 5 : i32
    %cst_49 = arith.constant dense<0.000000e+00> : vector<8x16xf32>
    %87 = tpu.matmul %82, %35, %cst_49 {dimension_numbers = #tpu.dot_dimension_numbers<[1], [0], [0], [1], [0, 0, 1, 1], [], []>} : vector<8x16xf32>, vector<16x16xf32>, vector<8x16xf32> -> vector<8x16xf32>
    %88 = arith.index_cast %c5_i32 : i32 to index
    %c0_50 = arith.constant 0 : index
    %c0_51 = arith.constant 0 : index
    %89 = vector.load %arg12[%88, %c0_50, %c0_51] : memref<8x8x16xf32, #tpu.memory_space<vmem>>, vector<1x8x16xf32>
    %90 = vector.shape_cast %89 : vector<1x8x16xf32> to vector<8x16xf32>
    %91 = arith.addf %87, %90 : vector<8x16xf32>
    %92 = math.tanh %91 : vector<8x16xf32>
    %93 = arith.index_cast %c5_i32 : i32 to index
    %c0_52 = arith.constant 0 : index
    %c0_53 = arith.constant 0 : index
    %94 = vector.load %arg13[%93, %c0_52, %c0_53] : memref<8x8x16xf32, #tpu.memory_space<vmem>>, vector<1x8x16xf32>
    %95 = vector.shape_cast %94 : vector<1x8x16xf32> to vector<8x16xf32>
    %96 = vector.shape_cast %92 : vector<8x16xf32> to vector<1x8x16xf32>
    tpu.vector_store %arg13[%93, %c0_52, %c0_53], %96 {strides = array<i32>} : memref<8x8x16xf32, #tpu.memory_space<vmem>>, vector<1x8x16xf32>,
    %c6_i32 = arith.constant 6 : i32
    %cst_54 = arith.constant dense<0.000000e+00> : vector<8x16xf32>
    %97 = tpu.matmul %92, %35, %cst_54 {dimension_numbers = #tpu.dot_dimension_numbers<[1], [0], [0], [1], [0, 0, 1, 1], [], []>} : vector<8x16xf32>, vector<16x16xf32>, vector<8x16xf32> -> vector<8x16xf32>
    %98 = arith.index_cast %c6_i32 : i32 to index
    %c0_55 = arith.constant 0 : index
    %c0_56 = arith.constant 0 : index
    %99 = vector.load %arg12[%98, %c0_55, %c0_56] : memref<8x8x16xf32, #tpu.memory_space<vmem>>, vector<1x8x16xf32>
    %100 = vector.shape_cast %99 : vector<1x8x16xf32> to vector<8x16xf32>
    %101 = arith.addf %97, %100 : vector<8x16xf32>
    %102 = math.tanh %101 : vector<8x16xf32>
    %103 = arith.index_cast %c6_i32 : i32 to index
    %c0_57 = arith.constant 0 : index
    %c0_58 = arith.constant 0 : index
    %104 = vector.load %arg13[%103, %c0_57, %c0_58] : memref<8x8x16xf32, #tpu.memory_space<vmem>>, vector<1x8x16xf32>
    %105 = vector.shape_cast %104 : vector<1x8x16xf32> to vector<8x16xf32>
    %106 = vector.shape_cast %102 : vector<8x16xf32> to vector<1x8x16xf32>
    tpu.vector_store %arg13[%103, %c0_57, %c0_58], %106 {strides = array<i32>} : memref<8x8x16xf32, #tpu.memory_space<vmem>>, vector<1x8x16xf32>,
    %c7_i32 = arith.constant 7 : i32
    %cst_59 = arith.constant dense<0.000000e+00> : vector<8x16xf32>
    %107 = tpu.matmul %102, %35, %cst_59 {dimension_numbers = #tpu.dot_dimension_numbers<[1], [0], [0], [1], [0, 0, 1, 1], [], []>} : vector<8x16xf32>, vector<16x16xf32>, vector<8x16xf32> -> vector<8x16xf32>
    %108 = arith.index_cast %c7_i32 : i32 to index
    %c0_60 = arith.constant 0 : index
    %c0_61 = arith.constant 0 : index
    %109 = vector.load %arg12[%108, %c0_60, %c0_61] : memref<8x8x16xf32, #tpu.memory_space<vmem>>, vector<1x8x16xf32>
    %110 = vector.shape_cast %109 : vector<1x8x16xf32> to vector<8x16xf32>
    %111 = arith.addf %107, %110 : vector<8x16xf32>
    %112 = math.tanh %111 : vector<8x16xf32>
    %113 = arith.index_cast %c7_i32 : i32 to index
    %c0_62 = arith.constant 0 : index
    %c0_63 = arith.constant 0 : index
    %114 = vector.load %arg13[%113, %c0_62, %c0_63] : memref<8x8x16xf32, #tpu.memory_space<vmem>>, vector<1x8x16xf32>
    %115 = vector.shape_cast %114 : vector<1x8x16xf32> to vector<8x16xf32>
    %116 = vector.shape_cast %112 : vector<8x16xf32> to vector<1x8x16xf32>
    tpu.vector_store %arg13[%113, %c0_62, %c0_63], %116 {strides = array<i32>} : memref<8x8x16xf32, #tpu.memory_space<vmem>>, vector<1x8x16xf32>,
    %c8_i32 = arith.constant 8 : i32
    %c0_64 = arith.constant 0 : index
    %c0_65 = arith.constant 0 : index
    %117 = vector.load %arg11[%c0_64, %c0_65] : memref<8x16xf32, #tpu.memory_space<vmem>>, vector<8x16xf32>
    tpu.vector_store %arg11[%c0_64, %c0_65], %112 {strides = array<i32>} : memref<8x16xf32, #tpu.memory_space<vmem>>, vector<8x16xf32>,
    %c0_66 = arith.constant 0 : index
    %c0_67 = arith.constant 0 : index
    %c0_68 = arith.constant 0 : index
    %118 = vector.load %arg13[%c0_66, %c0_67, %c0_68] : memref<8x8x16xf32, #tpu.memory_space<vmem>>, vector<8x8x16xf32>
    %119 = vector.shape_cast %118 : vector<8x8x16xf32> to vector<64x16xf32>
    %120 = arith.truncf %119 : vector<64x16xf32> to vector<64x16xbf16>
    %c0_69 = arith.constant 0 : index
    %c0_70 = arith.constant 0 : index
    %c0_71 = arith.constant 0 : index
    %121 = vector.load %arg2[%c0_69, %c0_70, %c0_71] : memref<8x8x32xf32, #tpu.memory_space<vmem>>, vector<8x8x32xf32>
    %122 = vector.shape_cast %121 : vector<8x8x32xf32> to vector<64x32xf32>
    %c0_72 = arith.constant 0 : index
    %c0_73 = arith.constant 0 : index
    %123 = vector.load %arg7[%c0_72, %c0_73] : memref<16x32xbf16, #tpu.memory_space<vmem>>, vector<16x32xbf16>
    %cst_74 = arith.constant dense<0.000000e+00> : vector<64x32xf32>
    %124 = tpu.matmul %120, %123, %cst_74 {dimension_numbers = #tpu.dot_dimension_numbers<[1], [0], [0], [1], [0, 0, 1, 1], [], []>} : vector<64x16xbf16>, vector<16x32xbf16>, vector<64x32xf32> -> vector<64x32xf32>
    %c0_75 = arith.constant 0 : index
    %c0_76 = arith.constant 0 : index
    %125 = vector.load %arg14[%c0_75, %c0_76] : memref<64x32xbf16, #tpu.memory_space<vmem>>, vector<64x32xbf16>
    %c0_77 = arith.constant 0 : index
    %c0_78 = arith.constant 0 : index
    %126 = vector.load %arg8[%c0_77, %c0_78] : memref<32x32xbf16, #tpu.memory_space<vmem>>, vector<32x32xbf16>
    %cst_79 = arith.constant dense<0.000000e+00> : vector<64x32xf32>
    %127 = tpu.matmul %125, %126, %cst_79 {dimension_numbers = #tpu.dot_dimension_numbers<[1], [0], [0], [1], [0, 0, 1, 1], [], []>} : vector<64x32xbf16>, vector<32x32xbf16>, vector<64x32xf32> -> vector<64x32xf32>
    %128 = arith.addf %124, %127 : vector<64x32xf32>
    %c0_80 = arith.constant 0 : index
    %c0_81 = arith.constant 0 : index
    %129 = vector.load %arg9[%c0_80, %c0_81] : memref<1x32xf32, #tpu.memory_space<vmem>>, vector<1x32xf32>
    %130 = vector.broadcast %129 : vector<1x32xf32> to vector<64x32xf32>
    %131 = arith.addf %128, %130 : vector<64x32xf32>
    %132 = arith.addf %131, %122 : vector<64x32xf32>
    %133 = vector.shape_cast %132 : vector<64x32xf32> to vector<8x8x32xf32>
    %c0_82 = arith.constant 0 : index
    %c0_83 = arith.constant 0 : index
    %c0_84 = arith.constant 0 : index
    %134 = vector.load %arg10[%c0_82, %c0_83, %c0_84] : memref<8x8x32xf32, #tpu.memory_space<vmem>>, vector<8x8x32xf32>
    tpu.vector_store %arg10[%c0_82, %c0_83, %c0_84], %133 {strides = array<i32>} : memref<8x8x32xf32, #tpu.memory_space<vmem>>, vector<8x8x32xf32>,
    return
  }
  func.func @transform_0(%arg0: i32, %arg1: i32) -> (i32, i32, i32) {
    %c0_i32 = arith.constant 0 : i32
    %c0_i32_0 = arith.constant 0 : i32
    return %arg1, %arg0, %c0_i32 : i32, i32, i32
  }
  func.func @transform_1(%arg0: i32, %arg1: i32) -> (i32, i32) {
    %c0_i32 = arith.constant 0 : i32
    %c0_i32_0 = arith.constant 0 : i32
    %c0_i32_1 = arith.constant 0 : i32
    return %c0_i32, %c0_i32_0 : i32, i32
  }
  func.func @transform_2(%arg0: i32, %arg1: i32) -> (i32, i32) {
    %c0_i32 = arith.constant 0 : i32
    %c0_i32_0 = arith.constant 0 : i32
    %c0_i32_1 = arith.constant 0 : i32
    return %c0_i32, %c0_i32_0 : i32, i32
  }
  func.func @transform_3(%arg0: i32, %arg1: i32) -> (i32, i32) {
    %c0_i32 = arith.constant 0 : i32
    %c0_i32_0 = arith.constant 0 : i32
    %c0_i32_1 = arith.constant 0 : i32
    return %c0_i32, %c0_i32_0 : i32, i32
  }
  func.func @transform_4(%arg0: i32, %arg1: i32) -> (i32, i32) {
    %c0_i32 = arith.constant 0 : i32
    %c0_i32_0 = arith.constant 0 : i32
    %c0_i32_1 = arith.constant 0 : i32
    return %c0_i32, %c0_i32_0 : i32, i32
  }
  func.func @transform_5(%arg0: i32, %arg1: i32) -> (i32, i32) {
    %c0_i32 = arith.constant 0 : i32
    %c0_i32_0 = arith.constant 0 : i32
    %c0_i32_1 = arith.constant 0 : i32
    return %c0_i32, %c0_i32_0 : i32, i32
  }
  func.func @transform_6(%arg0: i32, %arg1: i32) -> (i32, i32) {
    %c0_i32 = arith.constant 0 : i32
    %c0_i32_0 = arith.constant 0 : i32
    %c0_i32_1 = arith.constant 0 : i32
    return %c0_i32, %c0_i32_0 : i32, i32
  }
  func.func @transform_7(%arg0: i32, %arg1: i32) -> (i32, i32) {
    %c0_i32 = arith.constant 0 : i32
    %c0_i32_0 = arith.constant 0 : i32
    %c0_i32_1 = arith.constant 0 : i32
    return %c0_i32, %c0_i32_0 : i32, i32
  }
  func.func @transform_8(%arg0: i32, %arg1: i32) -> (i32, i32, i32) {
    %c0_i32 = arith.constant 0 : i32
    %c0_i32_0 = arith.constant 0 : i32
    return %arg1, %arg0, %c0_i32 : i32, i32, i32
  }
}

</mosaic_0001>

<llo_original>
// kernel: mamba_block.1
$region0: #{mamba_block.1}
  #allocation0 [shape = 'u32[]', space=smem, size = 0x4, offset = 0x4, fixed_abs, tag = 'smem constant byte address 0x4 - core index']
  #allocation1 [shape = 'u32[144,128]{1,0:T(1,128)}', space=vmem, size = 0x12000, scoped, tag = 'internal scratch']
  #allocation2 [shape = 'f32[8,16]{1,0:T(8,128)}', space=vmem, size = 0x1000, scoped, tag = 'scratch operand']
  #allocation3 [shape = 'f32[8,8,16]{2,1,0:T(8,128)}', space=vmem, size = 0x8000, scoped, tag = 'scratch operand']
  #allocation4 [shape = 'f32[8,8,16]{2,1,0:T(8,128)}', space=vmem, size = 0x8000, scoped, tag = 'scratch operand']
  #allocation5 [shape = 'bf16[64,32]{1,0:T(16,128)(2,1)}', space=vmem, size = 0x4000, scoped, tag = 'scratch operand']
  %s0 = inlined_call_operand.vmem [shape: f32[8,8,32], index: 0, kind: input, shape index: {}]
  %s1 = inlined_call_operand.vmem [shape: f32[1,32], index: 1, kind: input, shape index: {}]
  %s2 = inlined_call_operand.vmem [shape: f32[1,32], index: 2, kind: input, shape index: {}]
  %s3 = inlined_call_operand.vmem [shape: f32[16,16], index: 3, kind: input, shape index: {}]
  %s4 = inlined_call_operand.vmem [shape: bf16[32,16], index: 4, kind: input, shape index: {}]
  %s5 = inlined_call_operand.vmem [shape: bf16[16,32], index: 5, kind: input, shape index: {}]
  %s6 = inlined_call_operand.vmem [shape: bf16[32,32], index: 6, kind: input, shape index: {}]
  %s7 = inlined_call_operand.vmem [shape: f32[1,32], index: 7, kind: input, shape index: {}]
  %s8 = inlined_call_operand.vmem [shape: f32[8,8,32], index: 8, kind: output, shape index: {}]
  %s9 = sld [smem:[#allocation0]]
  $region46: #{mamba_block.1} parent=0
    _
  %s11 = ssub.s32 1, %s9
  %s12 = scalar_select 0, %s11, %s9
  // Predicated region
  $region2: #{mamba_block.1} parent=0 // pred_check
    _
  $region3: #{mamba_block.1} parent=0 // pred_check_branch
    %14 = sbr.rel (0) target = $region5
  $region4: #{mamba_block.1} parent=0 // pred_region
    _
  $region5: #{mamba_block.1} parent=0 // pred_fallthru
    _
  // Predicated region
  $region6: #{mamba_block.1} parent=0 // pred_check
    _
  $region7: #{mamba_block.1} parent=0 // pred_check_branch
    %16 = sbr.rel (0) target = $region9
  $region8: #{mamba_block.1} parent=0 // pred_region
    _
  $region9: #{mamba_block.1} parent=0 // pred_fallthru
    _
  // Predicated region
  $region10: #{mamba_block.1} parent=0 // pred_check
    _
  $region11: #{mamba_block.1} parent=0 // pred_check_branch
    %18 = sbr.rel (0) target = $region13
  $region12: #{mamba_block.1} parent=0 // pred_region
    _
  $region13: #{mamba_block.1} parent=0 // pred_fallthru
    _
  // Predicated region
  $region14: #{mamba_block.1} parent=0 // pred_check
    _
  $region15: #{mamba_block.1} parent=0 // pred_check_branch
    %20 = sbr.rel (0) target = $region17
  $region16: #{mamba_block.1} parent=0 // pred_region
    _
  $region17: #{mamba_block.1} parent=0 // pred_fallthru
    _
  // Predicated region
  $region18: #{mamba_block.1} parent=0 // pred_check
    _
  $region19: #{mamba_block.1} parent=0 // pred_check_branch
    %22 = sbr.rel (0) target = $region21
  $region20: #{mamba_block.1} parent=0 // pred_region
    _
  $region21: #{mamba_block.1} parent=0 // pred_fallthru
    _
  // Predicated region
  $region22: #{mamba_block.1} parent=0 // pred_check
    _
  $region23: #{mamba_block.1} parent=0 // pred_check_branch
    %24 = sbr.rel (0) target = $region25
  $region24: #{mamba_block.1} parent=0 // pred_region
    _
  $region25: #{mamba_block.1} parent=0 // pred_fallthru
    _
  // Predicated region
  $region26: #{mamba_block.1} parent=0 // pred_check
    _
  $region27: #{mamba_block.1} parent=0 // pred_check_branch
    %26 = sbr.rel (0) target = $region29
  $region28: #{mamba_block.1} parent=0 // pred_region
    _
  $region29: #{mamba_block.1} parent=0 // pred_fallthru
    _
  // Predicated region
  $region30: #{mamba_block.1} parent=0 // pred_check
    _
  $region31: #{mamba_block.1} parent=0 // pred_check_branch
    %28 = sbr.rel (0) target = $region33
  $region32: #{mamba_block.1} parent=0 // pred_region
    _
  $region33: #{mamba_block.1} parent=0 // pred_fallthru
    _
  %p30 = scmp.eq.s32.totalorder 0, 0
  // Predicated region
  $region34: #{mamba_block.1} parent=0 // pred_check
    %p31 = pneg %p30
  $region35: #{mamba_block.1} parent=0 // pred_check_branch
    %33 = sbr.rel (%p31) target = $region37
  $region36: #{mamba_block.1} parent=0 // pred_region
    %vm34 = vcmask 130048
    %35 = vst.msk [vmem:[#allocation2] sm:$0xff] %vm34, 0.0
  $region37: #{mamba_block.1} parent=0 // pred_fallthru
    _
  %v36 = vld [vmem:[%s0] sm:$0xff]
  %v37 = vld [vmem:[%s0 + $0x8] sm:$0xff]
  %v38 = vld [vmem:[%s0 + $0x10] sm:$0xff]
  %v39 = vld [vmem:[%s0 + $0x18] sm:$0xff]
  %v40 = vld [vmem:[%s0 + $0x20] sm:$0xff]
  %v41 = vld [vmem:[%s0 + $0x28] sm:$0xff]
  %v42 = vld [vmem:[%s0 + $0x30] sm:$0xff]
  %v43 = vld [vmem:[%s0 + $0x38] sm:$0xff]
  %v44 = vld [vmem:[%s1] sm:$0x1]
  %v45 = vld [vmem:[%s2] sm:$0x1]
  %vm46 = vcmask 261120
  %v47 = vsel %vm46, %v36, 0.0
  %48 = vadd.xlane.f32.xlu0 %v47
  %v49 = vpop.xlane.xlu0 %48
  %v50 = vsel %vm46, %v37, 0.0
  %51 = vadd.xlane.f32.xlu0 %v50
  %v52 = vpop.xlane.xlu0 %51
  %v53 = vsel %vm46, %v38, 0.0
  %54 = vadd.xlane.f32.xlu0 %v53
  %v55 = vpop.xlane.xlu0 %54
  %v56 = vsel %vm46, %v39, 0.0
  %57 = vadd.xlane.f32.xlu0 %v56
  %v58 = vpop.xlane.xlu0 %57
  %v59 = vsel %vm46, %v40, 0.0
  %60 = vadd.xlane.f32.xlu0 %v59
  %v61 = vpop.xlane.xlu0 %60
  %v62 = vsel %vm46, %v41, 0.0
  %63 = vadd.xlane.f32.xlu0 %v62
  %v64 = vpop.xlane.xlu0 %63
  %v65 = vsel %vm46, %v42, 0.0
  %66 = vadd.xlane.f32.xlu0 %v65
  %v67 = vpop.xlane.xlu0 %66
  %v68 = vsel %vm46, %v43, 0.0
  %69 = vadd.xlane.f32.xlu0 %v68
  %v70 = vpop.xlane.xlu0 %69
  %v71 = vrcp.pop 32.0
  %v72 = vmul.f32 %v49, %v71
  %v73 = vmul.f32 %v52, %v71
  %v74 = vmul.f32 %v55, %v71
  %v75 = vmul.f32 %v58, %v71
  %v76 = vmul.f32 %v61, %v71
  %v77 = vmul.f32 %v64, %v71
  %v78 = vmul.f32 %v67, %v71
  %v79 = vmul.f32 %v70, %v71
  %v80 = vsub.f32 %v36, %v72
  %v81 = vsub.f32 %v37, %v73
  %v82 = vsub.f32 %v38, %v74
  %v83 = vsub.f32 %v39, %v75
  %v84 = vsub.f32 %v40, %v76
  %v85 = vsub.f32 %v41, %v77
  %v86 = vsub.f32 %v42, %v78
  %v87 = vsub.f32 %v43, %v79
  %v88 = vmul.f32 %v80, %v80
  %v89 = vmul.f32 %v81, %v81
  %v90 = vmul.f32 %v82, %v82
  %v91 = vmul.f32 %v83, %v83
  %v92 = vmul.f32 %v84, %v84
  %v93 = vmul.f32 %v85, %v85
  %v94 = vmul.f32 %v86, %v86
  %v95 = vmul.f32 %v87, %v87
  %v96 = vsel %vm46, %v88, 0.0
  %97 = vadd.xlane.f32.xlu0 %v96
  %v98 = vpop.xlane.xlu0 %97
  %v99 = vsel %vm46, %v89, 0.0
  %100 = vadd.xlane.f32.xlu0 %v99
  %v101 = vpop.xlane.xlu0 %100
  %v102 = vsel %vm46, %v90, 0.0
  %103 = vadd.xlane.f32.xlu0 %v102
  %v104 = vpop.xlane.xlu0 %103
  %v105 = vsel %vm46, %v91, 0.0
  %106 = vadd.xlane.f32.xlu0 %v105
  %v107 = vpop.xlane.xlu0 %106
  %v108 = vsel %vm46, %v92, 0.0
  %109 = vadd.xlane.f32.xlu0 %v108
  %v110 = vpop.xlane.xlu0 %109
  %v111 = vsel %vm46, %v93, 0.0
  %112 = vadd.xlane.f32.xlu0 %v111
  %v113 = vpop.xlane.xlu0 %112
  %v114 = vsel %vm46, %v94, 0.0
  %115 = vadd.xlane.f32.xlu0 %v114
  %v116 = vpop.xlane.xlu0 %115
  %v117 = vsel %vm46, %v95, 0.0
  %118 = vadd.xlane.f32.xlu0 %v117
  %v119 = vpop.xlane.xlu0 %118
  %v120 = vmul.f32 %v98, %v71
  %v121 = vmul.f32 %v101, %v71
  %v122 = vmul.f32 %v104, %v71
  %v123 = vmul.f32 %v107, %v71
  %v124 = vmul.f32 %v110, %v71
  %v125 = vmul.f32 %v113, %v71
  %v126 = vmul.f32 %v116, %v71
  %v127 = vmul.f32 %v119, %v71
  %v128 = vadd.f32 %v120, 1e-05
  %v129 = vadd.f32 %v121, 1e-05
  %v130 = vadd.f32 %v122, 1e-05
  %v131 = vadd.f32 %v123, 1e-05
  %v132 = vadd.f32 %v124, 1e-05
  %v133 = vadd.f32 %v125, 1e-05
  %v134 = vadd.f32 %v126, 1e-05
  %v135 = vadd.f32 %v127, 1e-05
  %v136 = vrsqrt.pop %v128
  %v137 = vrsqrt.pop %v129
  %v138 = vrsqrt.pop %v130
  %v139 = vrsqrt.pop %v131
  %v140 = vrsqrt.pop %v132
  %v141 = vrsqrt.pop %v133
  %v142 = vrsqrt.pop %v134
  %v143 = vrsqrt.pop %v135
  %v144 = vmul.f32 %v80, %v136
  %v145 = vmul.f32 %v81, %v137
  %v146 = vmul.f32 %v82, %v138
  %v147 = vmul.f32 %v83, %v139
  %v148 = vmul.f32 %v84, %v140
  %v149 = vmul.f32 %v85, %v141
  %v150 = vmul.f32 %v86, %v142
  %v151 = vmul.f32 %v87, %v143
  %v153 = vlaneseq
  %v154 = vshrl.u32 %v153, 7
  %v155 = vsub.s32 0, %v154
  %v156 = vrot.slane %v44, %v155
  %v158 = vmul.f32 %v144, %v156
  %v159 = vmul.f32 %v145, %v156
  %v160 = vmul.f32 %v146, %v156
  %v161 = vmul.f32 %v147, %v156
  %v162 = vmul.f32 %v148, %v156
  %v163 = vmul.f32 %v149, %v156
  %v164 = vmul.f32 %v150, %v156
  %v165 = vmul.f32 %v151, %v156
  %v167 = vlaneseq
  %v168 = vshrl.u32 %v167, 7
  %v169 = vsub.s32 0, %v168
  %v170 = vrot.slane %v45, %v169
  %v172 = vadd.f32 %v158, %v170
  %v173 = vadd.f32 %v159, %v170
  %v174 = vadd.f32 %v160, %v170
  %v175 = vadd.f32 %v161, %v170
  %v176 = vadd.f32 %v162, %v170
  %v177 = vadd.f32 %v163, %v170
  %v178 = vadd.f32 %v164, %v170
  %v179 = vadd.f32 %v165, %v170
  %v180 = vpack.c.bf16 %v173, %v172
  %v181 = vpack.c.bf16 %v175, %v174
  %v182 = vpack.c.bf16 %v177, %v176
  %v183 = vpack.c.bf16 %v179, %v178
  %184 = vst.msk [vmem:[#allocation5] sm:$0xff] %vm46, %v180
  %185 = vst.msk [vmem:[#allocation5 + $0x8] sm:$0xff] %vm46, %v181
  %186 = vst.msk [vmem:[#allocation5 + $0x10] sm:$0xff] %vm46, %v182
  %187 = vst.msk [vmem:[#allocation5 + $0x18] sm:$0xff] %vm46, %v183
  %v188 = vld [vmem:[%s4] sm:$0xf]
  %v189 = vld [vmem:[%s4 + $0x4] sm:$0xf]
  %v190 = vld [vmem:[%s4 + $0x8] sm:$0xf]
  %v191 = vld [vmem:[%s4 + $0xc] sm:$0xf]
  %v196 = vunpack.c.l.b16 %v188
  %v197 = vunpack.c.l.b16 %v189
  %v198 = vunpack.c.l.b16 %v190
  %v199 = vunpack.c.l.b16 %v191
  %v200 = vpack.c.b16 %v197, %v196
  %v201 = vpack.c.b16 %v199, %v198
  %v205 = vsel %vm46, %v180, 0
  %v208 = vsel %vm46, %v181, 0
  %v211 = vsel %vm46, %v182, 0
  %v214 = vsel %vm46, %v183, 0
  %216 = vmatprep.subr.bf16.mxu0 0
  %217 = vmatpush1.bf16.msra.mxu0 %v200
  %218 = vmatprep.subr.bf16.mxu0 0
  %219 = vmatpush1.bf16.msra.mxu0 %v201
  %220 = vmatprep.subr.bf16.mxu0 0
  %221 = vmatpush1.bf16.msra.mxu0 0
  %222 = vmatprep.subr.bf16.mxu0 0
  %223 = vmatpush1.bf16.msra.mxu0 0
  %224 = vmatprep.subr.bf16.mxu0 0
  %225 = vmatpush1.bf16.msra.mxu0 0
  %226 = vmatprep.subr.bf16.mxu0 0
  %227 = vmatpush1.bf16.msra.mxu0 0
  %228 = vmatprep.subr.bf16.mxu0 0
  %229 = vmatpush1.bf16.msra.mxu0 0
  %230 = vmatprep.subr.bf16.mxu0 0
  %231 = vmatpush1.bf16.msra.mxu0 0
  %232 = vmatprep.subr.bf16.mxu0 0
  %233 = vmatpush1.bf16.msra.mxu0 0
  %234 = vmatprep.subr.bf16.mxu0 0
  %235 = vmatpush1.bf16.msra.mxu0 0
  %236 = vmatprep.subr.bf16.mxu0 0
  %237 = vmatpush1.bf16.msra.mxu0 0
  %238 = vmatprep.subr.bf16.mxu0 0
  %239 = vmatpush1.bf16.msra.mxu0 0
  %240 = vmatprep.subr.bf16.mxu0 0
  %241 = vmatpush1.bf16.msra.mxu0 0
  %242 = vmatprep.subr.bf16.mxu0 0
  %243 = vmatpush1.bf16.msra.mxu0 0
  %244 = vmatprep.subr.bf16.mxu0 0
  %245 = vmatpush1.bf16.msra.mxu0 0
  %246 = vmatprep.subr.bf16.mxu0 0
  %247 = vmatpush1.bf16.msra.mxu0 0
  %248 = vmatprep.mubr.bf16.mxu0 0
  %249 = vmatmul.mubr.bf16.gmra.mrb[0].mxu0 %v205
  %v250 = vpop.f32.mrb[0].mxu0
  %v251 = vadd.f32 0.0, %v250
  %v252 = vpop.f32.mrb[0].mxu0
  %v253 = vpop.f32.mrb[0].mxu0
  %v254 = vadd.f32 0.0, %v253
  %v255 = vpop.f32.mrb[0].mxu0
  %256 = vmatprep.mubr.bf16.mxu0 0
  %257 = vmatmul.mubr.bf16.gmra.mrb[0].mxu0 %v208
  %v258 = vpop.f32.mrb[0].mxu0
  %v259 = vadd.f32 0.0, %v258
  %v260 = vpop.f32.mrb[0].mxu0
  %v261 = vpop.f32.mrb[0].mxu0
  %v262 = vadd.f32 0.0, %v261
  %v263 = vpop.f32.mrb[0].mxu0
  %264 = vmatprep.mubr.bf16.mxu0 0
  %265 = vmatmul.mubr.bf16.gmra.mrb[0].mxu0 %v211
  %v266 = vpop.f32.mrb[0].mxu0
  %v267 = vadd.f32 0.0, %v266
  %v268 = vpop.f32.mrb[0].mxu0
  %v269 = vpop.f32.mrb[0].mxu0
  %v270 = vadd.f32 0.0, %v269
  %v271 = vpop.f32.mrb[0].mxu0
  %272 = vmatprep.mubr.bf16.mxu0 0
  %273 = vmatmul.mubr.bf16.gmra.mrb[0].mxu0 %v214
  %v274 = vpop.f32.mrb[0].mxu0
  %v275 = vadd.f32 0.0, %v274
  %v276 = vpop.f32.mrb[0].mxu0
  %v277 = vpop.f32.mrb[0].mxu0
  %v278 = vadd.f32 0.0, %v277
  %v279 = vpop.f32.mrb[0].mxu0
  %280 = vdwg.mxu0
  %vm281 = vcmask 130048
  %282 = vst.msk [vmem:[#allocation3] sm:$0xff] %vm281, %v251
  %283 = vst.msk [vmem:[#allocation3 + $0x8] sm:$0xff] %vm281, %v254
  %284 = vst.msk [vmem:[#allocation3 + $0x10] sm:$0xff] %vm281, %v259
  %285 = vst.msk [vmem:[#allocation3 + $0x18] sm:$0xff] %vm281, %v262
  %286 = vst.msk [vmem:[#allocation3 + $0x20] sm:$0xff] %vm281, %v267
  %287 = vst.msk [vmem:[#allocation3 + $0x28] sm:$0xff] %vm281, %v270
  %288 = vst.msk [vmem:[#allocation3 + $0x30] sm:$0xff] %vm281, %v275
  %289 = vst.msk [vmem:[#allocation3 + $0x38] sm:$0xff] %vm281, %v278
  %v290 = vld [vmem:[%s3] sm:$0xff]
  %v291 = vld [vmem:[%s3 + $0x8] sm:$0xff]
  %v292 = vld [vmem:[#allocation2] sm:$0xff]
  %v293 = vld [vmem:[#allocation3] sm:$0xff]
  %v295 = vsel %vm281, %v292, 0
  %297 = vmatprep.subr.mxu0 0.0
  %298 = vmatpush1.msra.mxu0 %v290
  %299 = vmatprep.subr.mxu0 0.0
  %300 = vmatpush1.msra.mxu0 %v291
  %301 = vmatprep.subr.mxu0 0.0
  %302 = vmatpush1.msra.mxu0 0.0
  %303 = vmatprep.subr.mxu0 0.0
  %304 = vmatpush1.msra.mxu0 0.0
  %305 = vmatprep.subr.mxu0 0.0
  %306 = vmatpush1.msra.mxu0 0.0
  %307 = vmatprep.subr.mxu0 0.0
  %308 = vmatpush1.msra.mxu0 0.0
  %309 = vmatprep.subr.mxu0 0.0
  %310 = vmatpush1.msra.mxu0 0.0
  %311 = vmatprep.subr.mxu0 0.0
  %312 = vmatpush1.msra.mxu0 0.0
  %313 = vmatprep.subr.mxu0 0.0
  %314 = vmatpush1.msra.mxu0 0.0
  %315 = vmatprep.subr.mxu0 0.0
  %316 = vmatpush1.msra.mxu0 0.0
  %317 = vmatprep.subr.mxu0 0.0
  %318 = vmatpush1.msra.mxu0 0.0
  %319 = vmatprep.subr.mxu0 0.0
  %320 = vmatpush1.msra.mxu0 0.0
  %321 = vmatprep.subr.mxu0 0.0
  %322 = vmatpush1.msra.mxu0 0.0
  %323 = vmatprep.subr.mxu0 0.0
  %324 = vmatpush1.msra.mxu0 0.0
  %325 = vmatprep.subr.mxu0 0.0
  %326 = vmatpush1.msra.mxu0 0.0
  %327 = vmatprep.subr.mxu0 0.0
  %328 = vmatpush1.msra.mxu0 0.0
  %329 = vmatprep.subr.mxu0 0.0
  %330 = vmatpush1.msra.mxu0 0.0
  %331 = vmatprep.subr.mxu0 0.0
  %332 = vmatpush1.msra.mxu0 0.0
  %333 = vmatprep.subr.mxu0 0.0
  %334 = vmatpush1.msra.mxu0 0.0
  %335 = vmatprep.subr.mxu0 0.0
  %336 = vmatpush1.msra.mxu0 0.0
  %337 = vmatprep.subr.mxu0 0.0
  %338 = vmatpush1.msra.mxu0 0.0
  %339 = vmatprep.subr.mxu0 0.0
  %340 = vmatpush1.msra.mxu0 0.0
  %341 = vmatprep.subr.mxu0 0.0
  %342 = vmatpush1.msra.mxu0 0.0
  %343 = vmatprep.subr.mxu0 0.0
  %344 = vmatpush1.msra.mxu0 0.0
  %345 = vmatprep.subr.mxu0 0.0
  %346 = vmatpush1.msra.mxu0 0.0
  %347 = vmatprep.subr.mxu0 0.0
  %348 = vmatpush1.msra.mxu0 0.0
  %349 = vmatprep.subr.mxu0 0.0
  %350 = vmatpush1.msra.mxu0 0.0
  %351 = vmatprep.subr.mxu0 0.0
  %352 = vmatpush1.msra.mxu0 0.0
  %353 = vmatprep.subr.mxu0 0.0
  %354 = vmatpush1.msra.mxu0 0.0
  %355 = vmatprep.subr.mxu0 0.0
  %356 = vmatpush1.msra.mxu0 0.0
  %357 = vmatprep.subr.mxu0 0.0
  %358 = vmatpush1.msra.mxu0 0.0
  %359 = vmatprep.subr.mxu0 0.0
  %360 = vmatpush1.msra.mxu0 0.0
  %361 = vmatprep.mubr.f32.mxu0 0.0
  %362 = vmatmul.mubr.f32.gmra.mrb[0].mxu0 %v295
  %v363 = vpop.f32.mrb[0].mxu0
  %v364 = vadd.f32 %v293, %v363
  %v365 = vpop.f32.mrb[0].mxu0
  %366 = vdwg.mxu0
  %v367 = vtanh.pop %v364
  %368 = vst.msk [vmem:[#allocation4] sm:$0xff] %vm281, %v367
  %s369 = scalar_lea.vmem [#allocation3], 8
  %v370 = vld [vmem:[%s369] sm:$0xff]
  %v372 = vsel %vm281, %v367, 0
  %374 = vmatprep.subr.mxu0 0.0
  %375 = vmatpush1.msra.mxu0 %v290
  %376 = vmatprep.subr.mxu0 0.0
  %377 = vmatpush1.msra.mxu0 %v291
  %378 = vmatprep.subr.mxu0 0.0
  %379 = vmatpush1.msra.mxu0 0.0
  %380 = vmatprep.subr.mxu0 0.0
  %381 = vmatpush1.msra.mxu0 0.0
  %382 = vmatprep.subr.mxu0 0.0
  %383 = vmatpush1.msra.mxu0 0.0
  %384 = vmatprep.subr.mxu0 0.0
  %385 = vmatpush1.msra.mxu0 0.0
  %386 = vmatprep.subr.mxu0 0.0
  %387 = vmatpush1.msra.mxu0 0.0
  %388 = vmatprep.subr.mxu0 0.0
  %389 = vmatpush1.msra.mxu0 0.0
  %390 = vmatprep.subr.mxu0 0.0
  %391 = vmatpush1.msra.mxu0 0.0
  %392 = vmatprep.subr.mxu0 0.0
  %393 = vmatpush1.msra.mxu0 0.0
  %394 = vmatprep.subr.mxu0 0.0
  %395 = vmatpush1.msra.mxu0 0.0
  %396 = vmatprep.subr.mxu0 0.0
  %397 = vmatpush1.msra.mxu0 0.0
  %398 = vmatprep.subr.mxu0 0.0
  %399 = vmatpush1.msra.mxu0 0.0
  %400 = vmatprep.subr.mxu0 0.0
  %401 = vmatpush1.msra.mxu0 0.0
  %402 = vmatprep.subr.mxu0 0.0
  %403 = vmatpush1.msra.mxu0 0.0
  %404 = vmatprep.subr.mxu0 0.0
  %405 = vmatpush1.msra.mxu0 0.0
  %406 = vmatprep.subr.mxu0 0.0
  %407 = vmatpush1.msra.mxu0 0.0
  %408 = vmatprep.subr.mxu0 0.0
  %409 = vmatpush1.msra.mxu0 0.0
  %410 = vmatprep.subr.mxu0 0.0
  %411 = vmatpush1.msra.mxu0 0.0
  %412 = vmatprep.subr.mxu0 0.0
  %413 = vmatpush1.msra.mxu0 0.0
  %414 = vmatprep.subr.mxu0 0.0
  %415 = vmatpush1.msra.mxu0 0.0
  %416 = vmatprep.subr.mxu0 0.0
  %417 = vmatpush1.msra.mxu0 0.0
  %418 = vmatprep.subr.mxu0 0.0
  %419 = vmatpush1.msra.mxu0 0.0
  %420 = vmatprep.subr.mxu0 0.0
  %421 = vmatpush1.msra.mxu0 0.0
  %422 = vmatprep.subr.mxu0 0.0
  %423 = vmatpush1.msra.mxu0 0.0
  %424 = vmatprep.subr.mxu0 0.0
  %425 = vmatpush1.msra.mxu0 0.0
  %426 = vmatprep.subr.mxu0 0.0
  %427 = vmatpush1.msra.mxu0 0.0
  %428 = vmatprep.subr.mxu0 0.0
  %429 = vmatpush1.msra.mxu0 0.0
  %430 = vmatprep.subr.mxu0 0.0
  %431 = vmatpush1.msra.mxu0 0.0
  %432 = vmatprep.subr.mxu0 0.0
  %433 = vmatpush1.msra.mxu0 0.0
  %434 = vmatprep.subr.mxu0 0.0
  %435 = vmatpush1.msra.mxu0 0.0
  %436 = vmatprep.subr.mxu0 0.0
  %437 = vmatpush1.msra.mxu0 0.0
  %438 = vmatprep.mubr.f32.mxu0 0.0
  %439 = vmatmul.mubr.f32.gmra.mrb[0].mxu0 %v372
  %v440 = vpop.f32.mrb[0].mxu0
  %v441 = vadd.f32 %v370, %v440
  %v442 = vpop.f32.mrb[0].mxu0
  %443 = vdwg.mxu0
  %v444 = vtanh.pop %v441
  %s445 = scalar_lea.vmem [#allocation4], 8
  %446 = vst.msk [vmem:[%s445] sm:$0xff] %vm281, %v444
  %s447 = scalar_lea.vmem [#allocation3], 16
  %v448 = vld [vmem:[%s447] sm:$0xff]
  %v450 = vsel %vm281, %v444, 0
  %452 = vmatprep.subr.mxu0 0.0
  %453 = vmatpush1.msra.mxu0 %v290
  %454 = vmatprep.subr.mxu0 0.0
  %455 = vmatpush1.msra.mxu0 %v291
  %456 = vmatprep.subr.mxu0 0.0
  %457 = vmatpush1.msra.mxu0 0.0
  %458 = vmatprep.subr.mxu0 0.0
  %459 = vmatpush1.msra.mxu0 0.0
  %460 = vmatprep.subr.mxu0 0.0
  %461 = vmatpush1.msra.mxu0 0.0
  %462 = vmatprep.subr.mxu0 0.0
  %463 = vmatpush1.msra.mxu0 0.0
  %464 = vmatprep.subr.mxu0 0.0
  %465 = vmatpush1.msra.mxu0 0.0
  %466 = vmatprep.subr.mxu0 0.0
  %467 = vmatpush1.msra.mxu0 0.0
  %468 = vmatprep.subr.mxu0 0.0
  %469 = vmatpush1.msra.mxu0 0.0
  %470 = vmatprep.subr.mxu0 0.0
  %471 = vmatpush1.msra.mxu0 0.0
  %472 = vmatprep.subr.mxu0 0.0
  %473 = vmatpush1.msra.mxu0 0.0
  %474 = vmatprep.subr.mxu0 0.0
  %475 = vmatpush1.msra.mxu0 0.0
  %476 = vmatprep.subr.mxu0 0.0
  %477 = vmatpush1.msra.mxu0 0.0
  %478 = vmatprep.subr.mxu0 0.0
  %479 = vmatpush1.msra.mxu0 0.0
  %480 = vmatprep.subr.mxu0 0.0
  %481 = vmatpush1.msra.mxu0 0.0
  %482 = vmatprep.subr.mxu0 0.0
  %483 = vmatpush1.msra.mxu0 0.0
  %484 = vmatprep.subr.mxu0 0.0
  %485 = vmatpush1.msra.mxu0 0.0
  %486 = vmatprep.subr.mxu0 0.0
  %487 = vmatpush1.msra.mxu0 0.0
  %488 = vmatprep.subr.mxu0 0.0
  %489 = vmatpush1.msra.mxu0 0.0
  %490 = vmatprep.subr.mxu0 0.0
  %491 = vmatpush1.msra.mxu0 0.0
  %492 = vmatprep.subr.mxu0 0.0
  %493 = vmatpush1.msra.mxu0 0.0
  %494 = vmatprep.subr.mxu0 0.0
  %495 = vmatpush1.msra.mxu0 0.0
  %496 = vmatprep.subr.mxu0 0.0
  %497 = vmatpush1.msra.mxu0 0.0
  %498 = vmatprep.subr.mxu0 0.0
  %499 = vmatpush1.msra.mxu0 0.0
  %500 = vmatprep.subr.mxu0 0.0
  %501 = vmatpush1.msra.mxu0 0.0
  %502 = vmatprep.subr.mxu0 0.0
  %503 = vmatpush1.msra.mxu0 0.0
  %504 = vmatprep.subr.mxu0 0.0
  %505 = vmatpush1.msra.mxu0 0.0
  %506 = vmatprep.subr.mxu0 0.0
  %507 = vmatpush1.msra.mxu0 0.0
  %508 = vmatprep.subr.mxu0 0.0
  %509 = vmatpush1.msra.mxu0 0.0
  %510 = vmatprep.subr.mxu0 0.0
  %511 = vmatpush1.msra.mxu0 0.0
  %512 = vmatprep.subr.mxu0 0.0
  %513 = vmatpush1.msra.mxu0 0.0
  %514 = vmatprep.subr.mxu0 0.0
  %515 = vmatpush1.msra.mxu0 0.0
  %516 = vmatprep.mubr.f32.mxu0 0.0
  %517 = vmatmul.mubr.f32.gmra.mrb[0].mxu0 %v450
  %v518 = vpop.f32.mrb[0].mxu0
  %v519 = vadd.f32 %v448, %v518
  %v520 = vpop.f32.mrb[0].mxu0
  %521 = vdwg.mxu0
  %v522 = vtanh.pop %v519
  %s523 = scalar_lea.vmem [#allocation4], 16
  %524 = vst.msk [vmem:[%s523] sm:$0xff] %vm281, %v522
  %s525 = scalar_lea.vmem [#allocation3], 24
  %v526 = vld [vmem:[%s525] sm:$0xff]
  %v528 = vsel %vm281, %v522, 0
  %530 = vmatprep.subr.mxu0 0.0
  %531 = vmatpush1.msra.mxu0 %v290
  %532 = vmatprep.subr.mxu0 0.0
  %533 = vmatpush1.msra.mxu0 %v291
  %534 = vmatprep.subr.mxu0 0.0
  %535 = vmatpush1.msra.mxu0 0.0
  %536 = vmatprep.subr.mxu0 0.0
  %537 = vmatpush1.msra.mxu0 0.0
  %538 = vmatprep.subr.mxu0 0.0
  %539 = vmatpush1.msra.mxu0 0.0
  %540 = vmatprep.subr.mxu0 0.0
  %541 = vmatpush1.msra.mxu0 0.0
  %542 = vmatprep.subr.mxu0 0.0
  %543 = vmatpush1.msra.mxu0 0.0
  %544 = vmatprep.subr.mxu0 0.0
  %545 = vmatpush1.msra.mxu0 0.0
  %546 = vmatprep.subr.mxu0 0.0
  %547 = vmatpush1.msra.mxu0 0.0
  %548 = vmatprep.subr.mxu0 0.0
  %549 = vmatpush1.msra.mxu0 0.0
  %550 = vmatprep.subr.mxu0 0.0
  %551 = vmatpush1.msra.mxu0 0.0
  %552 = vmatprep.subr.mxu0 0.0
  %553 = vmatpush1.msra.mxu0 0.0
  %554 = vmatprep.subr.mxu0 0.0
  %555 = vmatpush1.msra.mxu0 0.0
  %556 = vmatprep.subr.mxu0 0.0
  %557 = vmatpush1.msra.mxu0 0.0
  %558 = vmatprep.subr.mxu0 0.0
  %559 = vmatpush1.msra.mxu0 0.0
  %560 = vmatprep.subr.mxu0 0.0
  %561 = vmatpush1.msra.mxu0 0.0
  %562 = vmatprep.subr.mxu0 0.0
  %563 = vmatpush1.msra.mxu0 0.0
  %564 = vmatprep.subr.mxu0 0.0
  %565 = vmatpush1.msra.mxu0 0.0
  %566 = vmatprep.subr.mxu0 0.0
  %567 = vmatpush1.msra.mxu0 0.0
  %568 = vmatprep.subr.mxu0 0.0
  %569 = vmatpush1.msra.mxu0 0.0
  %570 = vmatprep.subr.mxu0 0.0
  %571 = vmatpush1.msra.mxu0 0.0
  %572 = vmatprep.subr.mxu0 0.0
  %573 = vmatpush1.msra.mxu0 0.0
  %574 = vmatprep.subr.mxu0 0.0
  %575 = vmatpush1.msra.mxu0 0.0
  %576 = vmatprep.subr.mxu0 0.0
  %577 = vmatpush1.msra.mxu0 0.0
  %578 = vmatprep.subr.mxu0 0.0
  %579 = vmatpush1.msra.mxu0 0.0
  %580 = vmatprep.subr.mxu0 0.0
  %581 = vmatpush1.msra.mxu0 0.0
  %582 = vmatprep.subr.mxu0 0.0
  %583 = vmatpush1.msra.mxu0 0.0
  %584 = vmatprep.subr.mxu0 0.0
  %585 = vmatpush1.msra.mxu0 0.0
  %586 = vmatprep.subr.mxu0 0.0
  %587 = vmatpush1.msra.mxu0 0.0
  %588 = vmatprep.subr.mxu0 0.0
  %589 = vmatpush1.msra.mxu0 0.0
  %590 = vmatprep.subr.mxu0 0.0
  %591 = vmatpush1.msra.mxu0 0.0
  %592 = vmatprep.subr.mxu0 0.0
  %593 = vmatpush1.msra.mxu0 0.0
  %594 = vmatprep.mubr.f32.mxu0 0.0
  %595 = vmatmul.mubr.f32.gmra.mrb[0].mxu0 %v528
  %v596 = vpop.f32.mrb[0].mxu0
  %v597 = vadd.f32 %v526, %v596
  %v598 = vpop.f32.mrb[0].mxu0
  %599 = vdwg.mxu0
  %v600 = vtanh.pop %v597
  %s601 = scalar_lea.vmem [#allocation4], 24
  %602 = vst.msk [vmem:[%s601] sm:$0xff] %vm281, %v600
  %s603 = scalar_lea.vmem [#allocation3], 32
  %v604 = vld [vmem:[%s603] sm:$0xff]
  %v606 = vsel %vm281, %v600, 0
  %608 = vmatprep.subr.mxu0 0.0
  %609 = vmatpush1.msra.mxu0 %v290
  %610 = vmatprep.subr.mxu0 0.0
  %611 = vmatpush1.msra.mxu0 %v291
  %612 = vmatprep.subr.mxu0 0.0
  %613 = vmatpush1.msra.mxu0 0.0
  %614 = vmatprep.subr.mxu0 0.0
  %615 = vmatpush1.msra.mxu0 0.0
  %616 = vmatprep.subr.mxu0 0.0
  %617 = vmatpush1.msra.mxu0 0.0
  %618 = vmatprep.subr.mxu0 0.0
  %619 = vmatpush1.msra.mxu0 0.0
  %620 = vmatprep.subr.mxu0 0.0
  %621 = vmatpush1.msra.mxu0 0.0
  %622 = vmatprep.subr.mxu0 0.0
  %623 = vmatpush1.msra.mxu0 0.0
  %624 = vmatprep.subr.mxu0 0.0
  %625 = vmatpush1.msra.mxu0 0.0
  %626 = vmatprep.subr.mxu0 0.0
  %627 = vmatpush1.msra.mxu0 0.0
  %628 = vmatprep.subr.mxu0 0.0
  %629 = vmatpush1.msra.mxu0 0.0
  %630 = vmatprep.subr.mxu0 0.0
  %631 = vmatpush1.msra.mxu0 0.0
  %632 = vmatprep.subr.mxu0 0.0
  %633 = vmatpush1.msra.mxu0 0.0
  %634 = vmatprep.subr.mxu0 0.0
  %635 = vmatpush1.msra.mxu0 0.0
  %636 = vmatprep.subr.mxu0 0.0
  %637 = vmatpush1.msra.mxu0 0.0
  %638 = vmatprep.subr.mxu0 0.0
  %639 = vmatpush1.msra.mxu0 0.0
  %640 = vmatprep.subr.mxu0 0.0
  %641 = vmatpush1.msra.mxu0 0.0
  %642 = vmatprep.subr.mxu0 0.0
  %643 = vmatpush1.msra.mxu0 0.0
  %644 = vmatprep.subr.mxu0 0.0
  %645 = vmatpush1.msra.mxu0 0.0
  %646 = vmatprep.subr.mxu0 0.0
  %647 = vmatpush1.msra.mxu0 0.0
  %648 = vmatprep.subr.mxu0 0.0
  %649 = vmatpush1.msra.mxu0 0.0
  %650 = vmatprep.subr.mxu0 0.0
  %651 = vmatpush1.msra.mxu0 0.0
  %652 = vmatprep.subr.mxu0 0.0
  %653 = vmatpush1.msra.mxu0 0.0
  %654 = vmatprep.subr.mxu0 0.0
  %655 = vmatpush1.msra.mxu0 0.0
  %656 = vmatprep.subr.mxu0 0.0
  %657 = vmatpush1.msra.mxu0 0.0
  %658 = vmatprep.subr.mxu0 0.0
  %659 = vmatpush1.msra.mxu0 0.0
  %660 = vmatprep.subr.mxu0 0.0
  %661 = vmatpush1.msra.mxu0 0.0
  %662 = vmatprep.subr.mxu0 0.0
  %663 = vmatpush1.msra.mxu0 0.0
  %664 = vmatprep.subr.mxu0 0.0
  %665 = vmatpush1.msra.mxu0 0.0
  %666 = vmatprep.subr.mxu0 0.0
  %667 = vmatpush1.msra.mxu0 0.0
  %668 = vmatprep.subr.mxu0 0.0
  %669 = vmatpush1.msra.mxu0 0.0
  %670 = vmatprep.subr.mxu0 0.0
  %671 = vmatpush1.msra.mxu0 0.0
  %672 = vmatprep.mubr.f32.mxu0 0.0
  %673 = vmatmul.mubr.f32.gmra.mrb[0].mxu0 %v606
  %v674 = vpop.f32.mrb[0].mxu0
  %v675 = vadd.f32 %v604, %v674
  %v676 = vpop.f32.mrb[0].mxu0
  %677 = vdwg.mxu0
  %v678 = vtanh.pop %v675
  %s679 = scalar_lea.vmem [#allocation4], 32
  %680 = vst.msk [vmem:[%s679] sm:$0xff] %vm281, %v678
  %s681 = scalar_lea.vmem [#allocation3], 40
  %v682 = vld [vmem:[%s681] sm:$0xff]
  %v684 = vsel %vm281, %v678, 0
  %686 = vmatprep.subr.mxu0 0.0
  %687 = vmatpush1.msra.mxu0 %v290
  %688 = vmatprep.subr.mxu0 0.0
  %689 = vmatpush1.msra.mxu0 %v291
  %690 = vmatprep.subr.mxu0 0.0
  %691 = vmatpush1.msra.mxu0 0.0
  %692 = vmatprep.subr.mxu0 0.0
  %693 = vmatpush1.msra.mxu0 0.0
  %694 = vmatprep.subr.mxu0 0.0
  %695 = vmatpush1.msra.mxu0 0.0
  %696 = vmatprep.subr.mxu0 0.0
  %697 = vmatpush1.msra.mxu0 0.0
  %698 = vmatprep.subr.mxu0 0.0
  %699 = vmatpush1.msra.mxu0 0.0
  %700 = vmatprep.subr.mxu0 0.0
  %701 = vmatpush1.msra.mxu0 0.0
  %702 = vmatprep.subr.mxu0 0.0
  %703 = vmatpush1.msra.mxu0 0.0
  %704 = vmatprep.subr.mxu0 0.0
  %705 = vmatpush1.msra.mxu0 0.0
  %706 = vmatprep.subr.mxu0 0.0
  %707 = vmatpush1.msra.mxu0 0.0
  %708 = vmatprep.subr.mxu0 0.0
  %709 = vmatpush1.msra.mxu0 0.0
  %710 = vmatprep.subr.mxu0 0.0
  %711 = vmatpush1.msra.mxu0 0.0
  %712 = vmatprep.subr.mxu0 0.0
  %713 = vmatpush1.msra.mxu0 0.0
  %714 = vmatprep.subr.mxu0 0.0
  %715 = vmatpush1.msra.mxu0 0.0
  %716 = vmatprep.subr.mxu0 0.0
  %717 = vmatpush1.msra.mxu0 0.0
  %718 = vmatprep.subr.mxu0 0.0
  %719 = vmatpush1.msra.mxu0 0.0
  %720 = vmatprep.subr.mxu0 0.0
  %721 = vmatpush1.msra.mxu0 0.0
  %722 = vmatprep.subr.mxu0 0.0
  %723 = vmatpush1.msra.mxu0 0.0
  %724 = vmatprep.subr.mxu0 0.0
  %725 = vmatpush1.msra.mxu0 0.0
  %726 = vmatprep.subr.mxu0 0.0
  %727 = vmatpush1.msra.mxu0 0.0
  %728 = vmatprep.subr.mxu0 0.0
  %729 = vmatpush1.msra.mxu0 0.0
  %730 = vmatprep.subr.mxu0 0.0
  %731 = vmatpush1.msra.mxu0 0.0
  %732 = vmatprep.subr.mxu0 0.0
  %733 = vmatpush1.msra.mxu0 0.0
  %734 = vmatprep.subr.mxu0 0.0
  %735 = vmatpush1.msra.mxu0 0.0
  %736 = vmatprep.subr.mxu0 0.0
  %737 = vmatpush1.msra.mxu0 0.0
  %738 = vmatprep.subr.mxu0 0.0
  %739 = vmatpush1.msra.mxu0 0.0
  %740 = vmatprep.subr.mxu0 0.0
  %741 = vmatpush1.msra.mxu0 0.0
  %742 = vmatprep.subr.mxu0 0.0
  %743 = vmatpush1.msra.mxu0 0.0
  %744 = vmatprep.subr.mxu0 0.0
  %745 = vmatpush1.msra.mxu0 0.0
  %746 = vmatprep.subr.mxu0 0.0
  %747 = vmatpush1.msra.mxu0 0.0
  %748 = vmatprep.subr.mxu0 0.0
  %749 = vmatpush1.msra.mxu0 0.0
  %750 = vmatprep.mubr.f32.mxu0 0.0
  %751 = vmatmul.mubr.f32.gmra.mrb[0].mxu0 %v684
  %v752 = vpop.f32.mrb[0].mxu0
  %v753 = vadd.f32 %v682, %v752
  %v754 = vpop.f32.mrb[0].mxu0
  %755 = vdwg.mxu0
  %v756 = vtanh.pop %v753
  %s757 = scalar_lea.vmem [#allocation4], 40
  %758 = vst.msk [vmem:[%s757] sm:$0xff] %vm281, %v756
  %s759 = scalar_lea.vmem [#allocation3], 48
  %v760 = vld [vmem:[%s759] sm:$0xff]
  %v762 = vsel %vm281, %v756, 0
  %764 = vmatprep.subr.mxu0 0.0
  %765 = vmatpush1.msra.mxu0 %v290
  %766 = vmatprep.subr.mxu0 0.0
  %767 = vmatpush1.msra.mxu0 %v291
  %768 = vmatprep.subr.mxu0 0.0
  %769 = vmatpush1.msra.mxu0 0.0
  %770 = vmatprep.subr.mxu0 0.0
  %771 = vmatpush1.msra.mxu0 0.0
  %772 = vmatprep.subr.mxu0 0.0
  %773 = vmatpush1.msra.mxu0 0.0
  %774 = vmatprep.subr.mxu0 0.0
  %775 = vmatpush1.msra.mxu0 0.0
  %776 = vmatprep.subr.mxu0 0.0
  %777 = vmatpush1.msra.mxu0 0.0
  %778 = vmatprep.subr.mxu0 0.0
  %779 = vmatpush1.msra.mxu0 0.0
  %780 = vmatprep.subr.mxu0 0.0
  %781 = vmatpush1.msra.mxu0 0.0
  %782 = vmatprep.subr.mxu0 0.0
  %783 = vmatpush1.msra.mxu0 0.0
  %784 = vmatprep.subr.mxu0 0.0
  %785 = vmatpush1.msra.mxu0 0.0
  %786 = vmatprep.subr.mxu0 0.0
  %787 = vmatpush1.msra.mxu0 0.0
  %788 = vmatprep.subr.mxu0 0.0
  %789 = vmatpush1.msra.mxu0 0.0
  %790 = vmatprep.subr.mxu0 0.0
  %791 = vmatpush1.msra.mxu0 0.0
  %792 = vmatprep.subr.mxu0 0.0
  %793 = vmatpush1.msra.mxu0 0.0
  %794 = vmatprep.subr.mxu0 0.0
  %795 = vmatpush1.msra.mxu0 0.0
  %796 = vmatprep.subr.mxu0 0.0
  %797 = vmatpush1.msra.mxu0 0.0
  %798 = vmatprep.subr.mxu0 0.0
  %799 = vmatpush1.msra.mxu0 0.0
  %800 = vmatprep.subr.mxu0 0.0
  %801 = vmatpush1.msra.mxu0 0.0
  %802 = vmatprep.subr.mxu0 0.0
  %803 = vmatpush1.msra.mxu0 0.0
  %804 = vmatprep.subr.mxu0 0.0
  %805 = vmatpush1.msra.mxu0 0.0
  %806 = vmatprep.subr.mxu0 0.0
  %807 = vmatpush1.msra.mxu0 0.0
  %808 = vmatprep.subr.mxu0 0.0
  %809 = vmatpush1.msra.mxu0 0.0
  %810 = vmatprep.subr.mxu0 0.0
  %811 = vmatpush1.msra.mxu0 0.0
  %812 = vmatprep.subr.mxu0 0.0
  %813 = vmatpush1.msra.mxu0 0.0
  %814 = vmatprep.subr.mxu0 0.0
  %815 = vmatpush1.msra.mxu0 0.0
  %816 = vmatprep.subr.mxu0 0.0
  %817 = vmatpush1.msra.mxu0 0.0
  %818 = vmatprep.subr.mxu0 0.0
  %819 = vmatpush1.msra.mxu0 0.0
  %820 = vmatprep.subr.mxu0 0.0
  %821 = vmatpush1.msra.mxu0 0.0
  %822 = vmatprep.subr.mxu0 0.0
  %823 = vmatpush1.msra.mxu0 0.0
  %824 = vmatprep.subr.mxu0 0.0
  %825 = vmatpush1.msra.mxu0 0.0
  %826 = vmatprep.subr.mxu0 0.0
  %827 = vmatpush1.msra.mxu0 0.0
  %828 = vmatprep.mubr.f32.mxu0 0.0
  %829 = vmatmul.mubr.f32.gmra.mrb[0].mxu0 %v762
  %v830 = vpop.f32.mrb[0].mxu0
  %v831 = vadd.f32 %v760, %v830
  %v832 = vpop.f32.mrb[0].mxu0
  %833 = vdwg.mxu0
  %v834 = vtanh.pop %v831
  %s835 = scalar_lea.vmem [#allocation4], 48
  %836 = vst.msk [vmem:[%s835] sm:$0xff] %vm281, %v834
  %s837 = scalar_lea.vmem [#allocation3], 56
  %v838 = vld [vmem:[%s837] sm:$0xff]
  %v840 = vsel %vm281, %v834, 0
  %842 = vmatprep.subr.mxu0 0.0
  %843 = vmatpush1.msra.mxu0 %v290
  %844 = vmatprep.subr.mxu0 0.0
  %845 = vmatpush1.msra.mxu0 %v291
  %846 = vmatprep.subr.mxu0 0.0
  %847 = vmatpush1.msra.mxu0 0.0
  %848 = vmatprep.subr.mxu0 0.0
  %849 = vmatpush1.msra.mxu0 0.0
  %850 = vmatprep.subr.mxu0 0.0
  %851 = vmatpush1.msra.mxu0 0.0
  %852 = vmatprep.subr.mxu0 0.0
  %853 = vmatpush1.msra.mxu0 0.0
  %854 = vmatprep.subr.mxu0 0.0
  %855 = vmatpush1.msra.mxu0 0.0
  %856 = vmatprep.subr.mxu0 0.0
  %857 = vmatpush1.msra.mxu0 0.0
  %858 = vmatprep.subr.mxu0 0.0
  %859 = vmatpush1.msra.mxu0 0.0
  %860 = vmatprep.subr.mxu0 0.0
  %861 = vmatpush1.msra.mxu0 0.0
  %862 = vmatprep.subr.mxu0 0.0
  %863 = vmatpush1.msra.mxu0 0.0
  %864 = vmatprep.subr.mxu0 0.0
  %865 = vmatpush1.msra.mxu0 0.0
  %866 = vmatprep.subr.mxu0 0.0
  %867 = vmatpush1.msra.mxu0 0.0
  %868 = vmatprep.subr.mxu0 0.0
  %869 = vmatpush1.msra.mxu0 0.0
  %870 = vmatprep.subr.mxu0 0.0
  %871 = vmatpush1.msra.mxu0 0.0
  %872 = vmatprep.subr.mxu0 0.0
  %873 = vmatpush1.msra.mxu0 0.0
  %874 = vmatprep.subr.mxu0 0.0
  %875 = vmatpush1.msra.mxu0 0.0
  %876 = vmatprep.subr.mxu0 0.0
  %877 = vmatpush1.msra.mxu0 0.0
  %878 = vmatprep.subr.mxu0 0.0
  %879 = vmatpush1.msra.mxu0 0.0
  %880 = vmatprep.subr.mxu0 0.0
  %881 = vmatpush1.msra.mxu0 0.0
  %882 = vmatprep.subr.mxu0 0.0
  %883 = vmatpush1.msra.mxu0 0.0
  %884 = vmatprep.subr.mxu0 0.0
  %885 = vmatpush1.msra.mxu0 0.0
  %886 = vmatprep.subr.mxu0 0.0
  %887 = vmatpush1.msra.mxu0 0.0
  %888 = vmatprep.subr.mxu0 0.0
  %889 = vmatpush1.msra.mxu0 0.0
  %890 = vmatprep.subr.mxu0 0.0
  %891 = vmatpush1.msra.mxu0 0.0
  %892 = vmatprep.subr.mxu0 0.0
  %893 = vmatpush1.msra.mxu0 0.0
  %894 = vmatprep.subr.mxu0 0.0
  %895 = vmatpush1.msra.mxu0 0.0
  %896 = vmatprep.subr.mxu0 0.0
  %897 = vmatpush1.msra.mxu0 0.0
  %898 = vmatprep.subr.mxu0 0.0
  %899 = vmatpush1.msra.mxu0 0.0
  %900 = vmatprep.subr.mxu0 0.0
  %901 = vmatpush1.msra.mxu0 0.0
  %902 = vmatprep.subr.mxu0 0.0
  %903 = vmatpush1.msra.mxu0 0.0
  %904 = vmatprep.subr.mxu0 0.0
  %905 = vmatpush1.msra.mxu0 0.0
  %906 = vmatprep.mubr.f32.mxu0 0.0
  %907 = vmatmul.mubr.f32.gmra.mrb[0].mxu0 %v840
  %v908 = vpop.f32.mrb[0].mxu0
  %v909 = vadd.f32 %v838, %v908
  %v910 = vpop.f32.mrb[0].mxu0
  %911 = vdwg.mxu0
  %v912 = vtanh.pop %v909
  %s913 = scalar_lea.vmem [#allocation4], 56
  %914 = vst.msk [vmem:[%s913] sm:$0xff] %vm281, %v912
  %915 = vst.msk [vmem:[#allocation2] sm:$0xff] %vm281, %v912
  %v916 = vld [vmem:[#allocation4] sm:$0xff]
  %v917 = vld [vmem:[#allocation4 + $0x8] sm:$0xff]
  %v918 = vld [vmem:[#allocation4 + $0x10] sm:$0xff]
  %v919 = vld [vmem:[#allocation4 + $0x18] sm:$0xff]
  %v920 = vld [vmem:[#allocation4 + $0x20] sm:$0xff]
  %v921 = vld [vmem:[#allocation4 + $0x28] sm:$0xff]
  %v922 = vld [vmem:[#allocation4 + $0x30] sm:$0xff]
  %v923 = vld [vmem:[#allocation4 + $0x38] sm:$0xff]
  %v924 = vpack.c.bf16 %v917, %v916
  %v925 = vpack.c.bf16 %v919, %v918
  %v926 = vpack.c.bf16 %v921, %v920
  %v927 = vpack.c.bf16 %v923, %v922
  %v928 = vld [vmem:[%s0] sm:$0xff]
  %v929 = vld [vmem:[%s0 + $0x8] sm:$0xff]
  %v930 = vld [vmem:[%s0 + $0x10] sm:$0xff]
  %v931 = vld [vmem:[%s0 + $0x18] sm:$0xff]
  %v932 = vld [vmem:[%s0 + $0x20] sm:$0xff]
  %v933 = vld [vmem:[%s0 + $0x28] sm:$0xff]
  %v934 = vld [vmem:[%s0 + $0x30] sm:$0xff]
  %v935 = vld [vmem:[%s0 + $0x38] sm:$0xff]
  %v936 = vld [vmem:[%s5] sm:$0xf]
  %v937 = vld [vmem:[%s5 + $0x4] sm:$0xf]
  %v938 = vld [vmem:[#allocation5] sm:$0xff]
  %v939 = vld [vmem:[#allocation5 + $0x8] sm:$0xff]
  %v940 = vld [vmem:[#allocation5 + $0x10] sm:$0xff]
  %v941 = vld [vmem:[#allocation5 + $0x18] sm:$0xff]
  %v942 = vld [vmem:[%s6] sm:$0xf]
  %v943 = vld [vmem:[%s6 + $0x4] sm:$0xf]
  %v944 = vld [vmem:[%s6 + $0x8] sm:$0xf]
  %v945 = vld [vmem:[%s6 + $0xc] sm:$0xf]
  %v950 = vunpack.c.l.b16 %v942
  %v951 = vunpack.c.l.b16 %v943
  %v952 = vunpack.c.l.b16 %v944
  %v953 = vunpack.c.l.b16 %v945
  %v954 = vpack.c.b16 %v951, %v950
  %v955 = vpack.c.b16 %v953, %v952
  %v959 = vsel %vm46, %v938, 0
  %v962 = vsel %vm46, %v939, 0
  %v965 = vsel %vm46, %v940, 0
  %v968 = vsel %vm46, %v941, 0
  %970 = vmatprep.subr.bf16.mxu0 0
  %971 = vmatpush1.bf16.msra.mxu0 %v954
  %972 = vmatprep.subr.bf16.mxu0 0
  %973 = vmatpush1.bf16.msra.mxu0 %v955
  %974 = vmatprep.subr.bf16.mxu0 0
  %975 = vmatpush1.bf16.msra.mxu0 0
  %976 = vmatprep.subr.bf16.mxu0 0
  %977 = vmatpush1.bf16.msra.mxu0 0
  %978 = vmatprep.subr.bf16.mxu0 0
  %979 = vmatpush1.bf16.msra.mxu0 0
  %980 = vmatprep.subr.bf16.mxu0 0
  %981 = vmatpush1.bf16.msra.mxu0 0
  %982 = vmatprep.subr.bf16.mxu0 0
  %983 = vmatpush1.bf16.msra.mxu0 0
  %984 = vmatprep.subr.bf16.mxu0 0
  %985 = vmatpush1.bf16.msra.mxu0 0
  %986 = vmatprep.subr.bf16.mxu0 0
  %987 = vmatpush1.bf16.msra.mxu0 0
  %988 = vmatprep.subr.bf16.mxu0 0
  %989 = vmatpush1.bf16.msra.mxu0 0
  %990 = vmatprep.subr.bf16.mxu0 0
  %991 = vmatpush1.bf16.msra.mxu0 0
  %992 = vmatprep.subr.bf16.mxu0 0
  %993 = vmatpush1.bf16.msra.mxu0 0
  %994 = vmatprep.subr.bf16.mxu0 0
  %995 = vmatpush1.bf16.msra.mxu0 0
  %996 = vmatprep.subr.bf16.mxu0 0
  %997 = vmatpush1.bf16.msra.mxu0 0
  %998 = vmatprep.subr.bf16.mxu0 0
  %999 = vmatpush1.bf16.msra.mxu0 0
  %1000 = vmatprep.subr.bf16.mxu0 0
  %1001 = vmatpush1.bf16.msra.mxu0 0
  %1002 = vmatprep.mubr.bf16.mxu0 0
  %1003 = vmatmul.mubr.bf16.gmra.mrb[0].mxu0 %v959
  %v1004 = vpop.f32.mrb[0].mxu0
  %v1005 = vadd.f32 0.0, %v1004
  %v1006 = vpop.f32.mrb[0].mxu0
  %v1007 = vpop.f32.mrb[0].mxu0
  %v1008 = vadd.f32 0.0, %v1007
  %v1009 = vpop.f32.mrb[0].mxu0
  %1010 = vmatprep.mubr.bf16.mxu0 0
  %1011 = vmatmul.mubr.bf16.gmra.mrb[0].mxu0 %v962
  %v1012 = vpop.f32.mrb[0].mxu0
  %v1013 = vadd.f32 0.0, %v1012
  %v1014 = vpop.f32.mrb[0].mxu0
  %v1015 = vpop.f32.mrb[0].mxu0
  %v1016 = vadd.f32 0.0, %v1015
  %v1017 = vpop.f32.mrb[0].mxu0
  %1018 = vmatprep.mubr.bf16.mxu0 0
  %1019 = vmatmul.mubr.bf16.gmra.mrb[0].mxu0 %v965
  %v1020 = vpop.f32.mrb[0].mxu0
  %v1021 = vadd.f32 0.0, %v1020
  %v1022 = vpop.f32.mrb[0].mxu0
  %v1023 = vpop.f32.mrb[0].mxu0
  %v1024 = vadd.f32 0.0, %v1023
  %v1025 = vpop.f32.mrb[0].mxu0
  %1026 = vmatprep.mubr.bf16.mxu0 0
  %1027 = vmatmul.mubr.bf16.gmra.mrb[0].mxu0 %v968
  %v1028 = vpop.f32.mrb[0].mxu0
  %v1029 = vadd.f32 0.0, %v1028
  %v1030 = vpop.f32.mrb[0].mxu0
  %v1031 = vpop.f32.mrb[0].mxu0
  %v1032 = vadd.f32 0.0, %v1031
  %v1033 = vpop.f32.mrb[0].mxu0
  %1034 = vdwg.mxu0
  %v1037 = vunpack.c.l.b16 %v936
  %v1038 = vunpack.c.l.b16 %v937
  %v1039 = vpack.c.b16 %v1038, %v1037
  %v1042 = vsel %vm281, %v924, 0
  %v1045 = vsel %vm281, %v925, 0
  %v1048 = vsel %vm281, %v926, 0
  %v1051 = vsel %vm281, %v927, 0
  %1053 = vmatprep.subr.bf16.mxu0 0
  %1054 = vmatpush1.bf16.msra.mxu0 %v1039
  %1055 = vmatprep.subr.bf16.mxu0 0
  %1056 = vmatpush1.bf16.msra.mxu0 0
  %1057 = vmatprep.subr.bf16.mxu0 0
  %1058 = vmatpush1.bf16.msra.mxu0 0
  %1059 = vmatprep.subr.bf16.mxu0 0
  %1060 = vmatpush1.bf16.msra.mxu0 0
  %1061 = vmatprep.subr.bf16.mxu0 0
  %1062 = vmatpush1.bf16.msra.mxu0 0
  %1063 = vmatprep.subr.bf16.mxu0 0
  %1064 = vmatpush1.bf16.msra.mxu0 0
  %1065 = vmatprep.subr.bf16.mxu0 0
  %1066 = vmatpush1.bf16.msra.mxu0 0
  %1067 = vmatprep.subr.bf16.mxu0 0
  %1068 = vmatpush1.bf16.msra.mxu0 0
  %1069 = vmatprep.subr.bf16.mxu0 0
  %1070 = vmatpush1.bf16.msra.mxu0 0
  %1071 = vmatprep.subr.bf16.mxu0 0
  %1072 = vmatpush1.bf16.msra.mxu0 0
  %1073 = vmatprep.subr.bf16.mxu0 0
  %1074 = vmatpush1.bf16.msra.mxu0 0
  %1075 = vmatprep.subr.bf16.mxu0 0
  %1076 = vmatpush1.bf16.msra.mxu0 0
  %1077 = vmatprep.subr.bf16.mxu0 0
  %1078 = vmatpush1.bf16.msra.mxu0 0
  %1079 = vmatprep.subr.bf16.mxu0 0
  %1080 = vmatpush1.bf16.msra.mxu0 0
  %1081 = vmatprep.subr.bf16.mxu0 0
  %1082 = vmatpush1.bf16.msra.mxu0 0
  %1083 = vmatprep.subr.bf16.mxu0 0
  %1084 = vmatpush1.bf16.msra.mxu0 0
  %1085 = vmatprep.mubr.bf16.mxu0 0
  %1086 = vmatmul.mubr.bf16.gmra.mrb[0].mxu0 %v1042
  %v1087 = vpop.f32.mrb[0].mxu0
  %v1088 = vadd.f32 %v1005, %v1087
  %v1089 = vpop.f32.mrb[0].mxu0
  %v1090 = vpop.f32.mrb[0].mxu0
  %v1091 = vadd.f32 %v1008, %v1090
  %v1092 = vpop.f32.mrb[0].mxu0
  %1093 = vmatprep.mubr.bf16.mxu0 0
  %1094 = vmatmul.mubr.bf16.gmra.mrb[0].mxu0 %v1045
  %v1095 = vpop.f32.mrb[0].mxu0
  %v1096 = vadd.f32 %v1013, %v1095
  %v1097 = vpop.f32.mrb[0].mxu0
  %v1098 = vpop.f32.mrb[0].mxu0
  %v1099 = vadd.f32 %v1016, %v1098
  %v1100 = vpop.f32.mrb[0].mxu0
  %1101 = vmatprep.mubr.bf16.mxu0 0
  %1102 = vmatmul.mubr.bf16.gmra.mrb[0].mxu0 %v1048
  %v1103 = vpop.f32.mrb[0].mxu0
  %v1104 = vadd.f32 %v1021, %v1103
  %v1105 = vpop.f32.mrb[0].mxu0
  %v1106 = vpop.f32.mrb[0].mxu0
  %v1107 = vadd.f32 %v1024, %v1106
  %v1108 = vpop.f32.mrb[0].mxu0
  %1109 = vmatprep.mubr.bf16.mxu0 0
  %1110 = vmatmul.mubr.bf16.gmra.mrb[0].mxu0 %v1051
  %v1111 = vpop.f32.mrb[0].mxu0
  %v1112 = vadd.f32 %v1029, %v1111
  %v1113 = vpop.f32.mrb[0].mxu0
  %v1114 = vpop.f32.mrb[0].mxu0
  %v1115 = vadd.f32 %v1032, %v1114
  %v1116 = vpop.f32.mrb[0].mxu0
  %1117 = vdwg.mxu0
  %v1118 = vld [vmem:[%s7] sm:$0x1]
  %v1120 = vlaneseq
  %v1121 = vshrl.u32 %v1120, 7
  %v1122 = vsub.s32 0, %v1121
  %v1123 = vrot.slane %v1118, %v1122
  %v1125 = vadd.f32 %v1088, %v1123
  %v1126 = vadd.f32 %v1091, %v1123
  %v1127 = vadd.f32 %v1096, %v1123
  %v1128 = vadd.f32 %v1099, %v1123
  %v1129 = vadd.f32 %v1104, %v1123
  %v1130 = vadd.f32 %v1107, %v1123
  %v1131 = vadd.f32 %v1112, %v1123
  %v1132 = vadd.f32 %v1115, %v1123
  %v1133 = vadd.f32 %v1125, %v928
  %v1134 = vadd.f32 %v1126, %v929
  %v1135 = vadd.f32 %v1127, %v930
  %v1136 = vadd.f32 %v1128, %v931
  %v1137 = vadd.f32 %v1129, %v932
  %v1138 = vadd.f32 %v1130, %v933
  %v1139 = vadd.f32 %v1131, %v934
  %v1140 = vadd.f32 %v1132, %v935
  %1141 = vst.msk [vmem:[%s8] sm:$0xff] %vm46, %v1133
  %1142 = vst.msk [vmem:[%s8 + $0x8] sm:$0xff] %vm46, %v1134
  %1143 = vst.msk [vmem:[%s8 + $0x10] sm:$0xff] %vm46, %v1135
  %1144 = vst.msk [vmem:[%s8 + $0x18] sm:$0xff] %vm46, %v1136
  %1145 = vst.msk [vmem:[%s8 + $0x20] sm:$0xff] %vm46, %v1137
  %1146 = vst.msk [vmem:[%s8 + $0x28] sm:$0xff] %vm46, %v1138
  %1147 = vst.msk [vmem:[%s8 + $0x30] sm:$0xff] %vm46, %v1139
  %1148 = vst.msk [vmem:[%s8 + $0x38] sm:$0xff] %vm46, %v1140
  // Predicated region
  $region38: #{mamba_block.1} parent=0 // pred_check
    _
  $region39: #{mamba_block.1} parent=0 // pred_check_branch
    %1150 = sbr.rel (0) target = $region41
  $region40: #{mamba_block.1} parent=0 // pred_region
    _
  $region41: #{mamba_block.1} parent=0 // pred_fallthru
    _
  // Predicated region
  $region42: #{mamba_block.1} parent=0 // pred_check
    _
  $region43: #{mamba_block.1} parent=0 // pred_check_branch
    %1152 = sbr.rel (0) target = $region45
  $region44: #{mamba_block.1} parent=0 // pred_region
    _
  $region45: #{mamba_block.1} parent=0 // pred_fallthru
    _

</llo_original>
